<compile_context>
chip_gen: v7x
topology: tpu7x:2x2x1
jax: 0.10.0
libtpu: 0.0.40
codegen_flags: <defaults>
</compile_context>

<pallas_src>
import jax
import jax.numpy as jnp
from jax.experimental import pallas as pl
from jax.experimental.pallas import tpu as pltpu
import numpy as np

_TILE_VMEM_BUDGET = 40 * 1024 * 1024   # per-step working-set target (v7x-safe)
_VMEM_LIMIT_BYTES = 56 * 1024 * 1024   # under v7x's 64 MiB physical VMEM


def _pick_batch_tile(B, per_elem_bytes, resident_bytes, *,
                     budget_bytes=_TILE_VMEM_BUDGET):
    """Largest divisor of B whose working set fits the VMEM budget; prefers a
    grid of >= 2 steps so both v7x TensorCores get work."""
    avail = max(budget_bytes - resident_bytes, per_elem_bytes)
    cap = max(1, avail // per_elem_bytes)
    divisors = [d for d in range(B, 0, -1) if B % d == 0]
    fitting = [d for d in divisors if d <= cap] or [1]
    tb = fitting[0]
    if B // tb < 2:                       # keep 2 TensorCores busy on v7x
        for d in fitting:
            if B // d >= 2:
                tb = d
                break
    return int(tb)


# ---------------------------------------------------------------------------
# Kernel 1: state-independent attention-feature projection (ctx2att).
# Hoisted out of the per-step kernel so a decode loop runs it once per sequence.
# Output is bf16 (it only feeds the tanh attention MLP).
# ---------------------------------------------------------------------------
def _ctx_proj_kernel(att_ref, w_ref, b_ref, out_ref):
    TB, L, A = att_ref.shape
    Hh = w_ref.shape[-1]
    att2d = att_ref[...].reshape(TB * L, A)                    # bf16
    p = jnp.dot(att2d, w_ref[...],
                preferred_element_type=jnp.float32) + b_ref[...]
    out_ref[...] = p.reshape(TB, L, Hh).astype(out_ref.dtype)


def precompute_ctx_projection(att_bf16, w_ctx_bf16, b_ctx, *, batch_tile=None):
    B, L, A = att_bf16.shape
    Hh = w_ctx_bf16.shape[-1]
    per_elem = 2 * L * A * 2 + 2 * L * Hh * 2 + L * Hh * 4     # dbl-buf io + f32 temp
    resident = 2 * (A * Hh * 2 + Hh * 4)
    TB = batch_tile if batch_tile is not None else _pick_batch_tile(
        B, per_elem, resident)
    assert B % TB == 0

    cost = pl.CostEstimate(
        flops=2 * B * L * A * Hh,
        transcendentals=0,
        bytes_accessed=int(B * L * A * 2 + A * Hh * 2 + Hh * 4 + B * L * Hh * 2))

    return pl.pallas_call(
        _ctx_proj_kernel,
        out_shape=jax.ShapeDtypeStruct((B, L, Hh), jnp.bfloat16),
        grid=(B // TB,),
        in_specs=[
            pl.BlockSpec((TB, L, A), lambda i: (i, 0, 0)),     # att_feats tile
            pl.BlockSpec((A, Hh), lambda i: (0, 0)),           # resident weight
            pl.BlockSpec((1, Hh), lambda i: (0, 0)),           # resident bias
        ],
        out_specs=pl.BlockSpec((TB, L, Hh), lambda i: (i, 0, 0)),
        compiler_params=pltpu.CompilerParams(
            dimension_semantics=("parallel",),
            vmem_limit_bytes=_VMEM_LIMIT_BYTES),
        cost_estimate=cost,
    )(att_bf16, w_ctx_bf16, b_ctx)


# ---------------------------------------------------------------------------
# Shared per-tile math: attention MLP + softmax + context + LSTM cell.
# ---------------------------------------------------------------------------
def _attend_and_lstm(p, att, xt, h_prev, c_prev,
                     w_h2a, b_h2a, w_alpha_row, b_alpha, w_ihx, w_chh):
    R = h_prev.shape[-1]
    h_bf = h_prev.astype(jnp.bfloat16)

    # attention MLP: e = alpha_net(tanh(p_att + h2att(h)))
    att_h = jnp.dot(h_bf, w_h2a, preferred_element_type=jnp.float32) + b_h2a   # (TB, Hh)
    t = jnp.tanh(p + att_h[:, None, :])                                        # (TB, L, Hh) f32
    # alpha_net (Hh -> 1): VPU multiply + XLU lane reduce, not an N=1 MXU matmul
    e = jnp.sum(t * w_alpha_row[None, :, :], axis=-1) + b_alpha                # (TB, L)

    # softmax over attention positions; divide via EUP approx reciprocal
    e = e - jnp.max(e, axis=-1, keepdims=True)
    pe = jnp.exp(e)
    alpha = pe * pl.reciprocal(jnp.sum(pe, axis=-1, keepdims=True), approx=True)

    # context vector on VPU/XLU: C[b, :] = sum_l alpha[b, l] * att[b, l, :]
    # (per-batch M=1 MXU matvecs never amortize the RHS push -> keep off MXU)
    C = jnp.sum(att * alpha[:, :, None], axis=1)                               # (TB, A) f32

    # single-step LSTM (bias=False). [C, h] share one K = A + R matmul so the
    # 256-row MXU on v6e/v7x is filled; xt (E not lane-aligned) stays separate.
    ch = jnp.concatenate([C.astype(jnp.bfloat16), h_bf], axis=-1)              # (TB, A+R)
    gates = (jnp.dot(xt.astype(jnp.bfloat16), w_ihx,
                     preferred_element_type=jnp.float32)
             + jnp.dot(ch, w_chh, preferred_element_type=jnp.float32))         # (TB, 4R)
    i_g = jax.nn.sigmoid(gates[:, 0 * R:1 * R])
    f_g = jax.nn.sigmoid(gates[:, 1 * R:2 * R])
    g_g = jnp.tanh(gates[:, 2 * R:3 * R])
    o_g = jax.nn.sigmoid(gates[:, 3 * R:4 * R])
    c_new = f_g * c_prev + i_g * g_g
    h_new = o_g * jnp.tanh(c_new)
    return alpha, h_new, c_new


# Kernel 2a: one decoder step, consuming a pre-projected (bf16) p_att stream.
def _core_step_kernel(xt_ref, att_ref, patt_ref, h_ref, c_ref,
                      w_h2a_ref, b_h2a_ref, w_al_ref, b_al_ref,
                      w_ihx_ref, w_chh_ref,
                      alpha_ref, h_out_ref, c_out_ref):
    alpha, h_new, c_new = _attend_and_lstm(
        patt_ref[...], att_ref[...], xt_ref[...], h_ref[...], c_ref[...],
        w_h2a_ref[...], b_h2a_ref[...], w_al_ref[...], b_al_ref[0, 0],
        w_ihx_ref[...], w_chh_ref[...])
    alpha_ref[...] = alpha.astype(alpha_ref.dtype)
    h_out_ref[...] = h_new.astype(h_out_ref.dtype)
    c_out_ref[...] = c_new.astype(c_out_ref.dtype)


# Kernel 2b: same step, recomputing ctx2att from the resident att tile
# (drops the p_att HBM stream entirely; useful when DMA-bound).
def _core_step_fused_kernel(xt_ref, att_ref, h_ref, c_ref,
                            w_ctx_ref, b_ctx_ref,
                            w_h2a_ref, b_h2a_ref, w_al_ref, b_al_ref,
                            w_ihx_ref, w_chh_ref,
                            alpha_ref, h_out_ref, c_out_ref):
    TB, L, A = att_ref.shape
    Hh = w_ctx_ref.shape[-1]
    att2d = att_ref[...].reshape(TB * L, A)
    p = (jnp.dot(att2d, w_ctx_ref[...], preferred_element_type=jnp.float32)
         + b_ctx_ref[...]).reshape(TB, L, Hh)
    alpha, h_new, c_new = _attend_and_lstm(
        p, att_ref[...], xt_ref[...], h_ref[...], c_ref[...],
        w_h2a_ref[...], b_h2a_ref[...], w_al_ref[...], b_al_ref[0, 0],
        w_ihx_ref[...], w_chh_ref[...])
    alpha_ref[...] = alpha.astype(alpha_ref.dtype)
    h_out_ref[...] = h_new.astype(h_out_ref.dtype)
    c_out_ref[...] = c_new.astype(c_out_ref.dtype)


def show_attend_tell_core(xt, fc_feats, att_feats, state, params,
                          *, p_att=None, batch_tile=None, recompute_ctx=False):
    """Pallas implementation of ShowAttendTellCore.forward (num_layers == 1).

    `p_att` (= ctx2att(att_feats), bf16) may be precomputed once per sequence
    with `precompute_ctx_projection`; with `recompute_ctx=True` it is instead
    recomputed inside the step kernel from the resident att tile.
    """
    del fc_feats                                   # unused by the torch forward
    h, c = state                                   # each (num_layers, B, R)
    B, L, A = att_feats.shape
    E = xt.shape[-1]
    R = h.shape[-1]
    Hh = params['w_h2a'].shape[-1]

    # bf16 MXU operands (one-time cast; in a decode loop do this once per sequence).
    att_bf16 = att_feats.astype(jnp.bfloat16)
    w_h2a = params['w_h2a'].astype(jnp.bfloat16)
    w_ih = params['w_ih']
    w_ih_x = w_ih[:E].astype(jnp.bfloat16)                     # (E, 4R): xt part
    # [C, h] gate weight: (A+R, 4R) single K=256 matmul on v6e/v7x.
    w_chh = jnp.concatenate([w_ih[E:], params['w_hh']], axis=0).astype(jnp.bfloat16)
    w_alpha_row = params['w_alpha'].reshape(1, Hh)             # f32 (VPU path)
    b_alpha = params['b_alpha'].reshape(1, 1)                  # scalar -> SMEM

    # VMEM-driven batch tile: double-buffered att/p_att streams + f32 temporaries.
    per_elem = 2 * L * A * 2 + L * A * 4 + L * Hh * 4 + 4096
    per_elem += (L * Hh * 4) if recompute_ctx else (2 * L * Hh * 2)
    resident = 2 * 2 * (R * Hh + E * 4 * R + (A + R) * 4 * R)
    if recompute_ctx:
        resident += 2 * 2 * A * Hh
    TB = batch_tile if batch_tile is not None else _pick_batch_tile(
        B, per_elem, resident)
    assert B % TB == 0, "batch_tile must divide batch"

    h_last = h[-1]
    c_last = c[-1]

    weight_specs = [
        pl.BlockSpec((R, Hh), lambda i: (0, 0)),               # w_h2a   (resident)
        pl.BlockSpec((1, Hh), lambda i: (0, 0)),               # b_h2a
        pl.BlockSpec((1, Hh), lambda i: (0, 0)),               # w_alpha row (f32)
        pl.BlockSpec(memory_space=pltpu.MemorySpace.SMEM),     # b_alpha scalar
        pl.BlockSpec((E, 4 * R), lambda i: (0, 0)),            # w_ih_x
        pl.BlockSpec((A + R, 4 * R), lambda i: (0, 0)),        # w_chh
    ]
    weight_args = (w_h2a, params['b_h2a'], w_alpha_row, b_alpha, w_ih_x, w_chh)

    if recompute_ctx:
        kernel = _core_step_fused_kernel
        in_specs = [
            pl.BlockSpec((TB, E), lambda i: (i, 0)),           # xt
            pl.BlockSpec((TB, L, A), lambda i: (i, 0, 0)),     # att_feats (bf16)
            pl.BlockSpec((TB, R), lambda i: (i, 0)),           # h_prev
            pl.BlockSpec((TB, R), lambda i: (i, 0)),           # c_prev
            pl.BlockSpec((A, Hh), lambda i: (0, 0)),           # w_ctx (resident)
            pl.BlockSpec((1, Hh), lambda i: (0, 0)),           # b_ctx
        ] + weight_specs
        args = (xt, att_bf16, h_last, c_last,
                params['w_ctx'].astype(jnp.bfloat16), params['b_ctx']) + weight_args
    else:
        if p_att is None:
            p_att = precompute_ctx_projection(
                att_bf16, params['w_ctx'].astype(jnp.bfloat16), params['b_ctx'])
        p_att = p_att.astype(jnp.bfloat16)                     # halve its HBM stream
        kernel = _core_step_kernel
        in_specs = [
            pl.BlockSpec((TB, E), lambda i: (i, 0)),           # xt
            pl.BlockSpec((TB, L, A), lambda i: (i, 0, 0)),     # att_feats (bf16)
            pl.BlockSpec((TB, L, Hh), lambda i: (i, 0, 0)),    # p_att (bf16)
            pl.BlockSpec((TB, R), lambda i: (i, 0)),           # h_prev
            pl.BlockSpec((TB, R), lambda i: (i, 0)),           # c_prev
        ] + weight_specs
        args = (xt, att_bf16, p_att, h_last, c_last) + weight_args

    flops = int(2 * B * R * Hh + 2 * B * L * Hh + 2 * B * L * A
                + 2 * B * (E + A + R) * 4 * R)
    if recompute_ctx:
        flops += int(2 * B * L * A * Hh)
    transc = int(B * L * Hh + B * L + 5 * B * R)
    bytes_accessed = int(
        xt.size * 4 + att_bf16.size * 2
        + (0 if recompute_ctx else B * L * Hh * 2)
        + 2 * B * R * 4
        + (w_h2a.size + w_ih_x.size + w_chh.size) * 2
        + (2 * Hh + 1) * 4
        + ((A * Hh * 2 + Hh * 4) if recompute_ctx else 0)
        + B * L * 4 + 2 * B * R * 4)
    cost = pl.CostEstimate(flops=flops, transcendentals=transc,
                           bytes_accessed=bytes_accessed)

    alpha, h_new, c_new = pl.pallas_call(
        kernel,
        out_shape=(jax.ShapeDtypeStruct((B, L), jnp.float32),
                   jax.ShapeDtypeStruct((B, R), jnp.float32),
                   jax.ShapeDtypeStruct((B, R), jnp.float32)),
        grid=(B // TB,),
        in_specs=in_specs,
        out_specs=(
            pl.BlockSpec((TB, L), lambda i: (i, 0)),           # alpha
            pl.BlockSpec((TB, R), lambda i: (i, 0)),           # h_new (== output)
            pl.BlockSpec((TB, R), lambda i: (i, 0)),           # c_new
        ),
        compiler_params=pltpu.CompilerParams(
            dimension_semantics=("parallel",),
            vmem_limit_bytes=_VMEM_LIMIT_BYTES),
        cost_estimate=cost,
    )(*args)

    output = h_new                                  # output == last-layer hidden
    new_state = (h_new[None], c_new[None])
    return alpha, output, new_state


# ---------------------------------------------------------------------------
# Pure-JAX f32 reference mirroring the torch forward (true module semantics).
# ---------------------------------------------------------------------------
def reference(xt, att_feats, state, params):
    h, c = state
    B, L, A = att_feats.shape
    R = h.shape[-1]
    p = att_feats.reshape(B * L, A) @ params['w_ctx'] + params['b_ctx']
    Hh = p.shape[-1]
    att_h = h[-1] @ params['w_h2a'] + params['b_h2a']
    e = jnp.tanh(p.reshape(B, L, Hh) + att_h[:, None, :])
    e = (e.reshape(B * L, Hh) @ params['w_alpha'] + params['b_alpha']).reshape(B, L)
    alpha = jax.nn.softmax(e, axis=-1)
    C = jnp.einsum('bl,bla->ba', alpha, att_feats)
    x = jnp.concatenate([xt, C], axis=1)
    gates = x @ params['w_ih'] + h[-1] @ params['w_hh']
    i_g = jax.nn.sigmoid(gates[:, 0 * R:1 * R])
    f_g = jax.nn.sigmoid(gates[:, 1 * R:2 * R])
    g_g = jnp.tanh(gates[:, 2 * R:3 * R])
    o_g = jax.nn.sigmoid(gates[:, 3 * R:4 * R])
    c_new = f_g * c[-1] + i_g * g_g
    h_new = o_g * jnp.tanh(c_new)
    return alpha, h_new, (h_new[None], c_new[None])


if __name__ == "__main__":
    # Small synthetic config with lane-friendly (128-multiple) feature dims.
    B, L = 16, 128              # batch, attention positions
    E = 64                      # input_encoding_size
    A = 128                     # att_feat_size
    Hh = 128                    # att_hid_size
    R = 128                     # rnn_size
    F_ = 64                     # fc_feat_size (unused by forward)

    key = jax.random.PRNGKey(0)
    ks = jax.random.split(key, 16)

    xt = jax.random.normal(ks[0], (B, E), jnp.float32)
    fc_feats = jax.random.normal(ks[1], (B, F_), jnp.float32)
    att_feats = jax.random.normal(ks[2], (B, L, A), jnp.float32)
    h0 = jax.random.normal(ks[3], (1, B, R), jnp.float32)
    c0 = jax.random.normal(ks[4], (1, B, R), jnp.float32)

    s = 0.05
    params = {
        # ctx2att: Linear(A, Hh)  -> weight passed transposed as (A, Hh)
        'w_ctx':   s * jax.random.normal(ks[5], (A, Hh), jnp.float32),
        'b_ctx':   s * jax.random.normal(ks[6], (1, Hh), jnp.float32),
        # h2att: Linear(R, Hh)
        'w_h2a':   s * jax.random.normal(ks[7], (R, Hh), jnp.float32),
        'b_h2a':   s * jax.random.normal(ks[8], (1, Hh), jnp.float32),
        # alpha_net: Linear(Hh, 1)
        'w_alpha': s * jax.random.normal(ks[9], (Hh, 1), jnp.float32),
        'b_alpha': s * jax.random.normal(ks[10], (1, 1), jnp.float32),
        # LSTM(E+A, R, num_layers=1, bias=False): weights transposed to (in, 4R)
        'w_ih':    s * jax.random.normal(ks[11], (E + A, 4 * R), jnp.float32),
        'w_hh':    s * jax.random.normal(ks[12], (R, 4 * R), jnp.float32),
        # h2rnn / att2rnn exist in __init__ but are unused in forward -> omitted.
    }

    # Reference (pure f32).
    alpha_r, out_r, (h_r, c_r) = reference(xt, att_feats, (h0, c0), params)

    # Path 1: hoisted bf16 p_att stream (default).
    alpha, output, (h_n, c_n) = show_attend_tell_core(
        xt, fc_feats, att_feats, (h0, c0), params)
    jax.block_until_ready((alpha, output, h_n, c_n))

    # Path 2: ctx2att recomputed inside the step kernel (no p_att stream).
    alpha2, output2, (h_n2, c_n2) = show_attend_tell_core(
        xt, fc_feats, att_feats, (h0, c0), params, recompute_ctx=True)
    jax.block_until_ready((alpha2, output2, h_n2, c_n2))

    # Correctness vs the pure-f32 reference. The kernels use bf16 MXU operands
    # (f32 accumulation), a bf16 p_att stream, and an approx reciprocal in the
    # softmax, so tolerances are relaxed accordingly.
    for (a_, o_, hh_, cc_) in ((alpha, output, h_n, c_n),
                               (alpha2, output2, h_n2, c_n2)):
        np.testing.assert_allclose(np.asarray(a_), np.asarray(alpha_r), rtol=5e-2, atol=5e-2)
        np.testing.assert_allclose(np.asarray(o_), np.asarray(out_r), rtol=5e-2, atol=5e-2)
        np.testing.assert_allclose(np.asarray(hh_), np.asarray(h_r), rtol=5e-2, atol=5e-2)
        np.testing.assert_allclose(np.asarray(cc_), np.asarray(c_r), rtol=5e-2, atol=5e-2)

    print("KERNEL_OK")
</pallas_src>

<mosaic_0001>
module attributes {stable_mosaic.version = 11 : i64} {
  func.func @_ctx_proj_kernel(%arg0: i32, %arg1: memref<8x128x128xbf16, #tpu.memory_space<vmem>>, %arg2: memref<128x128xbf16, #tpu.memory_space<vmem>>, %arg3: memref<1x128xf32, #tpu.memory_space<vmem>>, %arg4: memref<8x128x128xbf16, #tpu.memory_space<vmem>>) attributes {dimension_semantics = [#tpu.dimension_semantics<parallel>], iteration_bounds = array<i64: 2>, scalar_prefetch = 0 : i64, scratch_operands = 0 : i64, tpu.core_type = #tpu.core_type<tc>, window_params = [{transform_indices = @transform_0, window_bounds = array<i64: 8, 128, 128>}, {pipeline_mode = #tpu.pipeline_mode<synchronous>, transform_indices = @transform_1, window_bounds = array<i64: 128, 128>}, {pipeline_mode = #tpu.pipeline_mode<synchronous>, transform_indices = @transform_2, window_bounds = array<i64: 1, 128>}, {transform_indices = @transform_3, window_bounds = array<i64: 8, 128, 128>}]} {
    %c0 = arith.constant 0 : index
    %c0_0 = arith.constant 0 : index
    %c0_1 = arith.constant 0 : index
    %0 = vector.load %arg1[%c0, %c0_0, %c0_1] : memref<8x128x128xbf16, #tpu.memory_space<vmem>>, vector<8x128x128xbf16>
    %1 = vector.shape_cast %0 : vector<8x128x128xbf16> to vector<1024x128xbf16>
    %c0_2 = arith.constant 0 : index
    %c0_3 = arith.constant 0 : index
    %2 = vector.load %arg2[%c0_2, %c0_3] : memref<128x128xbf16, #tpu.memory_space<vmem>>, vector<128x128xbf16>
    %cst = arith.constant dense<0.000000e+00> : vector<1024x128xf32>
    %3 = tpu.matmul %1, %2, %cst {dimension_numbers = #tpu.dot_dimension_numbers<[1], [0], [0], [1], [0, 0, 1, 1], [], []>} : vector<1024x128xbf16>, vector<128x128xbf16>, vector<1024x128xf32> -> vector<1024x128xf32>
    %c0_4 = arith.constant 0 : index
    %c0_5 = arith.constant 0 : index
    %4 = vector.load %arg3[%c0_4, %c0_5] : memref<1x128xf32, #tpu.memory_space<vmem>>, vector<1x128xf32>
    %5 = vector.broadcast %4 : vector<1x128xf32> to vector<1024x128xf32>
    %6 = arith.addf %3, %5 : vector<1024x128xf32>
    %7 = vector.shape_cast %6 : vector<1024x128xf32> to vector<8x128x128xf32>
    %8 = arith.truncf %7 : vector<8x128x128xf32> to vector<8x128x128xbf16>
    %c0_6 = arith.constant 0 : index
    %c0_7 = arith.constant 0 : index
    %c0_8 = arith.constant 0 : index
    %9 = vector.load %arg4[%c0_6, %c0_7, %c0_8] : memref<8x128x128xbf16, #tpu.memory_space<vmem>>, vector<8x128x128xbf16>
    tpu.vector_store %arg4[%c0_6, %c0_7, %c0_8], %8 {strides = array<i32>} : memref<8x128x128xbf16, #tpu.memory_space<vmem>>, vector<8x128x128xbf16>,
    return
  }
  func.func @transform_0(%arg0: i32) -> (i32, i32, i32) {
    %c0_i32 = arith.constant 0 : i32
    %c0_i32_0 = arith.constant 0 : i32
    %c0_i32_1 = arith.constant 0 : i32
    return %arg0, %c0_i32, %c0_i32_0 : i32, i32, i32
  }
  func.func @transform_1(%arg0: i32) -> (i32, i32) {
    %c0_i32 = arith.constant 0 : i32
    %c0_i32_0 = arith.constant 0 : i32
    %c0_i32_1 = arith.constant 0 : i32
    return %c0_i32, %c0_i32_0 : i32, i32
  }
  func.func @transform_2(%arg0: i32) -> (i32, i32) {
    %c0_i32 = arith.constant 0 : i32
    %c0_i32_0 = arith.constant 0 : i32
    %c0_i32_1 = arith.constant 0 : i32
    return %c0_i32, %c0_i32_0 : i32, i32
  }
  func.func @transform_3(%arg0: i32) -> (i32, i32, i32) {
    %c0_i32 = arith.constant 0 : i32
    %c0_i32_0 = arith.constant 0 : i32
    %c0_i32_1 = arith.constant 0 : i32
    return %arg0, %c0_i32, %c0_i32_0 : i32, i32, i32
  }
}

</mosaic_0001>

<llo_original>
// kernel: tpu_custom_call.1
$region0: #{tpu_custom_call.1}
  #allocation0 [shape = 'u32[]', space=smem, size = 0x4, offset = 0x4, fixed_abs, tag = 'smem constant byte address 0x4 - core index']
  #allocation1 [shape = 'u32[144,128]{1,0:T(1,128)}', space=vmem, size = 0x12000, scoped, tag = 'internal scratch']
  %s0 = inlined_call_operand.hbm [shape: bf16[16,128,128], index: 0, kind: input, shape index: {}]
  %s1 = inlined_call_operand.hbm [shape: bf16[128,128], index: 1, kind: input, shape index: {}]
  %s2 = inlined_call_operand.vmem [shape: f32[1,128], index: 2, kind: input, shape index: {}]
  %s3 = inlined_call_operand.hbm [shape: bf16[16,128,128], index: 3, kind: output, shape index: {}]
  %s4 = sld [smem:[#allocation0]]
  $region53: #{tpu_custom_call.1} parent=0
    _
  %s6 = ssub.s32 1, %s4
  %s7 = scalar_select 0, %s6, %s4
  $region1: #{tpu_custom_call.1} parent=0
    #allocation2 [shape = 'u8[524288]{0}', space=vmem, size = 0x80000, scoped, tag = 'input window, operand 0']
    #allocation3 [shape = 's32[2]{0}', space=sflag, size = 0x8, scoped, tag = 'scoped memory for tpu_custom_call.1']
    #allocation4 [shape = 's32[2]{0}', space=sflag, size = 0x8, scoped, tag = 'scoped memory for tpu_custom_call.1']
    #allocation5 [shape = 'u8[32768]{0}', space=vmem, size = 0x8000, scoped, tag = 'input window, operand 1, single buffered']
    #allocation6 [shape = 's32[1]{0}', space=sflag, size = 0x4, scoped, tag = 'scoped memory for tpu_custom_call.1']
    #allocation7 [shape = 'u8[524288]{0}', space=vmem, size = 0x80000, scoped, tag = 'output window, operand 0']
    %8 = vsyncpa [#allocation3], 0
    %s9 = scalar_lea.sflag [#allocation3], 1
    %10 = vsyncpa %s9, 0
    %11 = vsyncpa [#allocation6], 0
    %12 = vsyncpa [#allocation4], 0
    %s13 = scalar_lea.sflag [#allocation4], 1
    %14 = vsyncpa %s13, 0
    loop: start=0, step=1, limit=4
    $region2: #{tpu_custom_call.1} parent=1 // loop_pre_header
      _
    $region3: #{tpu_custom_call.1} parent=1 // loop_header
      %s16 = sphi 0, %s20
      %p17 = scmp.ge.s32.totalorder %s16, 4
      %s26 = sphi 0, %s28
      %s29 = sphi 0, %s26
      %s30 = sphi 0, %s29
      %s46 = sphi 0, %s30
      %s50 = sphi 0, %s50
      %s52 = sphi 0, %s50
      %s53 = sphi 0, %s52
      %s67 = sphi 0, %s53
      %s71 = sphi 0, %s71
      %s73 = sphi 0, %s71
      %s74 = sphi 0, %s73
      %s88 = sphi 0, %s74
      %s94 = sphi 0, %s96
      %s97 = sphi 0, %s94
      %s98 = sphi 0, %s97
      %s114 = sphi 0, %s98
    $region4: #{tpu_custom_call.1} parent=1 // loop_header_branch
      %19 = sbr.rel (%p17) target = $region8
    $region5: #{tpu_custom_call.1} parent=1 // loop_body
      %s21 = ssub.s32 %s16, 1
      %s22 = ssub.s32 %s16, 2
      %s23 = sadd.s32 %s16, 1
      %s24 = ssub.s32 %s16, %s23
      %p25 = scmp.eq.s32.totalorder %s24, 0
      %s27 = sadd.s32 %s26, 1
      %s28 = scalar_select %p25, %s26, %s27
      %p31 = pneg %p25
      %p32 = scmp.eq.s32.totalorder %s16, 1
      %p33 = por %p31, %p32
      %p34 = scmp.ne.s32.totalorder %s26, %s29
      %p35 = scmp.eq.s32.totalorder %s16, 0
      %p36 = por %p34, %p35
      %p37 = scmp.ne.s32.totalorder %s26, %s29
      %p38 = scmp.eq.s32.totalorder %s21, 1
      %p39 = por %p37, %p38
      %p40 = scmp.ne.s32.totalorder %s29, %s30
      %p41 = scmp.eq.s32.totalorder %s21, 0
      %p42 = por %p40, %p41
      %p43 = scmp.ne.s32.totalorder %s29, %s30
      %p44 = scmp.eq.s32.totalorder %s22, 1
      %p45 = por %p43, %p44
      %p47 = scmp.ne.s32.totalorder %s30, %s46
      %p48 = scmp.eq.s32.totalorder %s22, 0
      %p49 = por %p47, %p48
      %s51 = sadd.s32 %s50, 1
      %p54 = scmp.eq.s32.totalorder %s16, 1
      %p55 = scmp.ne.s32.totalorder %s50, %s52
      %p56 = scmp.eq.s32.totalorder %s16, 0
      %p57 = por %p55, %p56
      %p58 = scmp.ne.s32.totalorder %s50, %s52
      %p59 = scmp.eq.s32.totalorder %s21, 1
      %p60 = por %p58, %p59
      %p61 = scmp.ne.s32.totalorder %s52, %s53
      %p62 = scmp.eq.s32.totalorder %s21, 0
      %p63 = por %p61, %p62
      %p64 = scmp.ne.s32.totalorder %s52, %s53
      %p65 = scmp.eq.s32.totalorder %s22, 1
      %p66 = por %p64, %p65
      %p68 = scmp.ne.s32.totalorder %s53, %s67
      %p69 = scmp.eq.s32.totalorder %s22, 0
      %p70 = por %p68, %p69
      %s72 = sadd.s32 %s71, 1
      %p75 = scmp.eq.s32.totalorder %s16, 1
      %p76 = scmp.ne.s32.totalorder %s71, %s73
      %p77 = scmp.eq.s32.totalorder %s16, 0
      %p78 = por %p76, %p77
      %p79 = scmp.ne.s32.totalorder %s71, %s73
      %p80 = scmp.eq.s32.totalorder %s21, 1
      %p81 = por %p79, %p80
      %p82 = scmp.ne.s32.totalorder %s73, %s74
      %p83 = scmp.eq.s32.totalorder %s21, 0
      %p84 = por %p82, %p83
      %p85 = scmp.ne.s32.totalorder %s73, %s74
      %p86 = scmp.eq.s32.totalorder %s22, 1
      %p87 = por %p85, %p86
      %p89 = scmp.ne.s32.totalorder %s74, %s88
      %p90 = scmp.eq.s32.totalorder %s22, 0
      %p91 = por %p89, %p90
      %s92 = ssub.s32 %s16, %s23
      %p93 = scmp.eq.s32.totalorder %s92, 0
      %s95 = sadd.s32 %s94, 1
      %s96 = scalar_select %p93, %s94, %s95
      %p99 = pneg %p93
      %p100 = scmp.eq.s32.totalorder %s16, 1
      %p101 = por %p99, %p100
      %p102 = scmp.ne.s32.totalorder %s94, %s97
      %p103 = scmp.eq.s32.totalorder %s16, 0
      %p104 = por %p102, %p103
      %p105 = scmp.ne.s32.totalorder %s94, %s97
      %p106 = scmp.eq.s32.totalorder %s21, 1
      %p107 = por %p105, %p106
      %p108 = scmp.ne.s32.totalorder %s97, %s98
      %p109 = scmp.eq.s32.totalorder %s21, 0
      %p110 = por %p108, %p109
      %p111 = scmp.ne.s32.totalorder %s97, %s98
      %p112 = scmp.eq.s32.totalorder %s22, 1
      %p113 = por %p111, %p112
      %p115 = scmp.ne.s32.totalorder %s98, %s114
      %p116 = scmp.eq.s32.totalorder %s22, 0
      %p117 = por %p115, %p116
      %p118 = scmp.le.s32.totalorder 1, %s16
      %p119 = scmp.lt.s32.totalorder %s16, 3
      %p120 = pnand %p118, %p119
      %p121 = pneg %p120
      // Predicated region
      $region9: #{tpu_custom_call.1} parent=5 // pred_check
        _
      $region10: #{tpu_custom_call.1} parent=5 // pred_check_branch
        %123 = sbr.rel (%p120) target = $region12
      $region11: #{tpu_custom_call.1} parent=5 // pred_region
        %s124 = ssub.s32 %s16, 1
        // Predicated region
        $region13: #{tpu_custom_call.1} parent=11 // pred_check
          %p125 = pneg %p63
        $region14: #{tpu_custom_call.1} parent=11 // pred_check_branch
          %127 = sbr.rel (%p125) target = $region16
        $region15: #{tpu_custom_call.1} parent=11 // pred_region
          %s129 = ssub.s32 1024, 1024
          %130 = vsyncadd [#allocation6], %s129
          %s131 = sshll.u32 [#allocation5], 4
          %s132 = int_to_ptr.vmem [resolvable:$true] %s131
          %137 = dma.hbm_to_vmem [thread:$0]  %s1, 1024, %s132, [#allocation6], 64, 64, 4
        $region16: #{tpu_custom_call.1} parent=11 // pred_fallthru
          _
        // Predicated region
        $region17: #{tpu_custom_call.1} parent=11 // pred_check
          %p138 = pneg %p84
        $region18: #{tpu_custom_call.1} parent=11 // pred_check_branch
          %140 = sbr.rel (%p138) target = $region20
        $region19: #{tpu_custom_call.1} parent=11 // pred_region
          _
        $region20: #{tpu_custom_call.1} parent=11 // pred_fallthru
          _
      $region12: #{tpu_custom_call.1} parent=5 // pred_fallthru
        _
      %p141 = scmp.lt.s32.totalorder %s16, 2
      // Predicated region
      $region21: #{tpu_custom_call.1} parent=5 // pred_check
        %p142 = pneg %p141
      $region22: #{tpu_custom_call.1} parent=5 // pred_check_branch
        %144 = sbr.rel (%p142) target = $region24
      $region23: #{tpu_custom_call.1} parent=5 // pred_region
        // Predicated region
        $region25: #{tpu_custom_call.1} parent=23 // pred_check
          %p145 = pneg %p36
        $region26: #{tpu_custom_call.1} parent=23 // pred_check_branch
          %147 = sbr.rel (%p145) target = $region28
        $region27: #{tpu_custom_call.1} parent=23 // pred_region
          %s148 = sand.u32 %s26, 1
          %s149 = scalar_lea.sflag [#allocation3], %s148
          %s150 = sand.u32 %s26, 1
          %s151 = smul.addr %s150, 512
          %s152 = scalar_lea.vmem [#allocation2], %s151
          %s153 = smul.u32 8, %s16
          %s155 = ssub.s32 8192, 8192
          %156 = vsyncadd %s149, %s155
          %s157 = smul.addr %s153, 16
          %s158 = smul.addr %s157, 64
          %s159 = scalar_lea.hbm %s0, %s158
          %s160 = sshll.u32 %s152, 4
          %s161 = int_to_ptr.vmem [resolvable:$true] %s160
          %166 = dma.hbm_to_vmem [thread:$0]  %s159, 8192, %s161, %s149, 64, 64, 4
        $region28: #{tpu_custom_call.1} parent=23 // pred_fallthru
          _
      $region24: #{tpu_custom_call.1} parent=5 // pred_fallthru
        _
      %p167 = scmp.le.s32.totalorder 1, %s16
      %p168 = scmp.lt.s32.totalorder %s16, 3
      %p169 = pnand %p167, %p168
      %p170 = pneg %p169
      // Predicated region
      $region29: #{tpu_custom_call.1} parent=5 // pred_check
        _
      $region30: #{tpu_custom_call.1} parent=5 // pred_check_branch
        %172 = sbr.rel (%p169) target = $region32
      $region31: #{tpu_custom_call.1} parent=5 // pred_region
        %s173 = ssub.s32 %s16, 1
        %s174 = sand.u32 %s29, 1
        %s175 = scalar_lea.sflag [#allocation3], %s174
        %s176 = sand.u32 %s29, 1
        %s177 = smul.addr %s176, 512
        %s178 = scalar_lea.vmem [#allocation2], %s177
        // Predicated region
        $region33: #{tpu_custom_call.1} parent=31 // pred_check
          %p179 = pneg %p42
        $region34: #{tpu_custom_call.1} parent=31 // pred_check_branch
          %181 = sbr.rel (%p179) target = $region36
        $region35: #{tpu_custom_call.1} parent=31 // pred_region
          %182 = dma.done %s175, 8192
        $region36: #{tpu_custom_call.1} parent=31 // pred_fallthru
          _
        // Predicated region
        $region37: #{tpu_custom_call.1} parent=31 // pred_check
          %p183 = pneg %p63
        $region38: #{tpu_custom_call.1} parent=31 // pred_check_branch
          %185 = sbr.rel (%p183) target = $region40
        $region39: #{tpu_custom_call.1} parent=31 // pred_region
          %186 = dma.done [#allocation6], 1024
        $region40: #{tpu_custom_call.1} parent=31 // pred_fallthru
          _
        %s187 = sand.u32 %s29, 1
        %s188 = scalar_lea.sflag [#allocation3], %s187
        %s189 = sand.u32 %s29, 1
        %s190 = smul.addr %s189, 512
        %s191 = scalar_lea.vmem [#allocation2], %s190
        %p192 = pneg %p42
        %p193 = pneg %p39
        %p194 = pneg %p63
        %p195 = pneg %p60
        %p196 = pneg %p84
        %p197 = pneg %p81
        %p198 = pneg %p110
        %p199 = pneg %p107
        %s200 = sand.u32 %s97, 1
        %s201 = scalar_lea.sflag [#allocation4], %s200
        %s202 = sand.u32 %s97, 1
        %s203 = smul.addr %s202, 512
        %s204 = scalar_lea.vmem [#allocation7], %s203
        %s205 = smul.u32 8, %s21
        %s206 = smul.u32 8, %s21
        %v208 = vld [vmem:[%s178] sm:$0xf]
        %v209 = vld [vmem:[%s178 + $0x4] sm:$0xf]
        %v210 = vld [vmem:[%s178 + $0x8] sm:$0xf]
        %v211 = vld [vmem:[%s178 + $0xc] sm:$0xf]
        %v212 = vld [vmem:[%s178 + $0x10] sm:$0xf]
        %v213 = vld [vmem:[%s178 + $0x14] sm:$0xf]
        %v214 = vld [vmem:[%s178 + $0x18] sm:$0xf]
        %v215 = vld [vmem:[%s178 + $0x1c] sm:$0xf]
        %v216 = vld [vmem:[%s178 + $0x20] sm:$0xf]
        %v217 = vld [vmem:[%s178 + $0x24] sm:$0xf]
        %v218 = vld [vmem:[%s178 + $0x28] sm:$0xf]
        %v219 = vld [vmem:[%s178 + $0x2c] sm:$0xf]
        %v220 = vld [vmem:[%s178 + $0x30] sm:$0xf]
        %v221 = vld [vmem:[%s178 + $0x34] sm:$0xf]
        %v222 = vld [vmem:[%s178 + $0x38] sm:$0xf]
        %v223 = vld [vmem:[%s178 + $0x3c] sm:$0xf]
        %v224 = vld [vmem:[%s178 + $0x40] sm:$0xf]
        %v225 = vld [vmem:[%s178 + $0x44] sm:$0xf]
        %v226 = vld [vmem:[%s178 + $0x48] sm:$0xf]
        %v227 = vld [vmem:[%s178 + $0x4c] sm:$0xf]
        %v228 = vld [vmem:[%s178 + $0x50] sm:$0xf]
        %v229 = vld [vmem:[%s178 + $0x54] sm:$0xf]
        %v230 = vld [vmem:[%s178 + $0x58] sm:$0xf]
        %v231 = vld [vmem:[%s178 + $0x5c] sm:$0xf]
        %v232 = vld [vmem:[%s178 + $0x60] sm:$0xf]
        %v233 = vld [vmem:[%s178 + $0x64] sm:$0xf]
        %v234 = vld [vmem:[%s178 + $0x68] sm:$0xf]
        %v235 = vld [vmem:[%s178 + $0x6c] sm:$0xf]
        %v236 = vld [vmem:[%s178 + $0x70] sm:$0xf]
        %v237 = vld [vmem:[%s178 + $0x74] sm:$0xf]
        %v238 = vld [vmem:[%s178 + $0x78] sm:$0xf]
        %v239 = vld [vmem:[%s178 + $0x7c] sm:$0xf]
        %v240 = vld [vmem:[%s178 + $0x80] sm:$0xf]
        %v241 = vld [vmem:[%s178 + $0x84] sm:$0xf]
        %v242 = vld [vmem:[%s178 + $0x88] sm:$0xf]
        %v243 = vld [vmem:[%s178 + $0x8c] sm:$0xf]
        %v244 = vld [vmem:[%s178 + $0x90] sm:$0xf]
        %v245 = vld [vmem:[%s178 + $0x94] sm:$0xf]
        %v246 = vld [vmem:[%s178 + $0x98] sm:$0xf]
        %v247 = vld [vmem:[%s178 + $0x9c] sm:$0xf]
        %v248 = vld [vmem:[%s178 + $0xa0] sm:$0xf]
        %v249 = vld [vmem:[%s178 + $0xa4] sm:$0xf]
        %v250 = vld [vmem:[%s178 + $0xa8] sm:$0xf]
        %v251 = vld [vmem:[%s178 + $0xac] sm:$0xf]
        %v252 = vld [vmem:[%s178 + $0xb0] sm:$0xf]
        %v253 = vld [vmem:[%s178 + $0xb4] sm:$0xf]
        %v254 = vld [vmem:[%s178 + $0xb8] sm:$0xf]
        %v255 = vld [vmem:[%s178 + $0xbc] sm:$0xf]
        %v256 = vld [vmem:[%s178 + $0xc0] sm:$0xf]
        %v257 = vld [vmem:[%s178 + $0xc4] sm:$0xf]
        %v258 = vld [vmem:[%s178 + $0xc8] sm:$0xf]
        %v259 = vld [vmem:[%s178 + $0xcc] sm:$0xf]
        %v260 = vld [vmem:[%s178 + $0xd0] sm:$0xf]
        %v261 = vld [vmem:[%s178 + $0xd4] sm:$0xf]
        %v262 = vld [vmem:[%s178 + $0xd8] sm:$0xf]
        %v263 = vld [vmem:[%s178 + $0xdc] sm:$0xf]
        %v264 = vld [vmem:[%s178 + $0xe0] sm:$0xf]
        %v265 = vld [vmem:[%s178 + $0xe4] sm:$0xf]
        %v266 = vld [vmem:[%s178 + $0xe8] sm:$0xf]
        %v267 = vld [vmem:[%s178 + $0xec] sm:$0xf]
        %v268 = vld [vmem:[%s178 + $0xf0] sm:$0xf]
        %v269 = vld [vmem:[%s178 + $0xf4] sm:$0xf]
        %v270 = vld [vmem:[%s178 + $0xf8] sm:$0xf]
        %v271 = vld [vmem:[%s178 + $0xfc] sm:$0xf]
        %v272 = vld [vmem:[%s178 + $0x100] sm:$0xf]
        %v273 = vld [vmem:[%s178 + $0x104] sm:$0xf]
        %v274 = vld [vmem:[%s178 + $0x108] sm:$0xf]
        %v275 = vld [vmem:[%s178 + $0x10c] sm:$0xf]
        %v276 = vld [vmem:[%s178 + $0x110] sm:$0xf]
        %v277 = vld [vmem:[%s178 + $0x114] sm:$0xf]
        %v278 = vld [vmem:[%s178 + $0x118] sm:$0xf]
        %v279 = vld [vmem:[%s178 + $0x11c] sm:$0xf]
        %v280 = vld [vmem:[%s178 + $0x120] sm:$0xf]
        %v281 = vld [vmem:[%s178 + $0x124] sm:$0xf]
        %v282 = vld [vmem:[%s178 + $0x128] sm:$0xf]
        %v283 = vld [vmem:[%s178 + $0x12c] sm:$0xf]
        %v284 = vld [vmem:[%s178 + $0x130] sm:$0xf]
        %v285 = vld [vmem:[%s178 + $0x134] sm:$0xf]
        %v286 = vld [vmem:[%s178 + $0x138] sm:$0xf]
        %v287 = vld [vmem:[%s178 + $0x13c] sm:$0xf]
        %v288 = vld [vmem:[%s178 + $0x140] sm:$0xf]
        %v289 = vld [vmem:[%s178 + $0x144] sm:$0xf]
        %v290 = vld [vmem:[%s178 + $0x148] sm:$0xf]
        %v291 = vld [vmem:[%s178 + $0x14c] sm:$0xf]
        %v292 = vld [vmem:[%s178 + $0x150] sm:$0xf]
        %v293 = vld [vmem:[%s178 + $0x154] sm:$0xf]
        %v294 = vld [vmem:[%s178 + $0x158] sm:$0xf]
        %v295 = vld [vmem:[%s178 + $0x15c] sm:$0xf]
        %v296 = vld [vmem:[%s178 + $0x160] sm:$0xf]
        %v297 = vld [vmem:[%s178 + $0x164] sm:$0xf]
        %v298 = vld [vmem:[%s178 + $0x168] sm:$0xf]
        %v299 = vld [vmem:[%s178 + $0x16c] sm:$0xf]
        %v300 = vld [vmem:[%s178 + $0x170] sm:$0xf]
        %v301 = vld [vmem:[%s178 + $0x174] sm:$0xf]
        %v302 = vld [vmem:[%s178 + $0x178] sm:$0xf]
        %v303 = vld [vmem:[%s178 + $0x17c] sm:$0xf]
        %v304 = vld [vmem:[%s178 + $0x180] sm:$0xf]
        %v305 = vld [vmem:[%s178 + $0x184] sm:$0xf]
        %v306 = vld [vmem:[%s178 + $0x188] sm:$0xf]
        %v307 = vld [vmem:[%s178 + $0x18c] sm:$0xf]
        %v308 = vld [vmem:[%s178 + $0x190] sm:$0xf]
        %v309 = vld [vmem:[%s178 + $0x194] sm:$0xf]
        %v310 = vld [vmem:[%s178 + $0x198] sm:$0xf]
        %v311 = vld [vmem:[%s178 + $0x19c] sm:$0xf]
        %v312 = vld [vmem:[%s178 + $0x1a0] sm:$0xf]
        %v313 = vld [vmem:[%s178 + $0x1a4] sm:$0xf]
        %v314 = vld [vmem:[%s178 + $0x1a8] sm:$0xf]
        %v315 = vld [vmem:[%s178 + $0x1ac] sm:$0xf]
        %v316 = vld [vmem:[%s178 + $0x1b0] sm:$0xf]
        %v317 = vld [vmem:[%s178 + $0x1b4] sm:$0xf]
        %v318 = vld [vmem:[%s178 + $0x1b8] sm:$0xf]
        %v319 = vld [vmem:[%s178 + $0x1bc] sm:$0xf]
        %v320 = vld [vmem:[%s178 + $0x1c0] sm:$0xf]
        %v321 = vld [vmem:[%s178 + $0x1c4] sm:$0xf]
        %v322 = vld [vmem:[%s178 + $0x1c8] sm:$0xf]
        %v323 = vld [vmem:[%s178 + $0x1cc] sm:$0xf]
        %v324 = vld [vmem:[%s178 + $0x1d0] sm:$0xf]
        %v325 = vld [vmem:[%s178 + $0x1d4] sm:$0xf]
        %v326 = vld [vmem:[%s178 + $0x1d8] sm:$0xf]
        %v327 = vld [vmem:[%s178 + $0x1dc] sm:$0xf]
        %v328 = vld [vmem:[%s178 + $0x1e0] sm:$0xf]
        %v329 = vld [vmem:[%s178 + $0x1e4] sm:$0xf]
        %v330 = vld [vmem:[%s178 + $0x1e8] sm:$0xf]
        %v331 = vld [vmem:[%s178 + $0x1ec] sm:$0xf]
        %v332 = vld [vmem:[%s178 + $0x1f0] sm:$0xf]
        %v333 = vld [vmem:[%s178 + $0x1f4] sm:$0xf]
        %v334 = vld [vmem:[%s178 + $0x1f8] sm:$0xf]
        %v335 = vld [vmem:[%s178 + $0x1fc] sm:$0xf]
        %v336 = vld [vmem:[#allocation5] sm:$0xf]
        %v337 = vld [vmem:[#allocation5 + $0x4] sm:$0xf]
        %v338 = vld [vmem:[#allocation5 + $0x8] sm:$0xf]
        %v339 = vld [vmem:[#allocation5 + $0xc] sm:$0xf]
        %v340 = vld [vmem:[#allocation5 + $0x10] sm:$0xf]
        %v341 = vld [vmem:[#allocation5 + $0x14] sm:$0xf]
        %v342 = vld [vmem:[#allocation5 + $0x18] sm:$0xf]
        %v343 = vld [vmem:[#allocation5 + $0x1c] sm:$0xf]
        %v344 = vld [vmem:[#allocation5 + $0x20] sm:$0xf]
        %v345 = vld [vmem:[#allocation5 + $0x24] sm:$0xf]
        %v346 = vld [vmem:[#allocation5 + $0x28] sm:$0xf]
        %v347 = vld [vmem:[#allocation5 + $0x2c] sm:$0xf]
        %v348 = vld [vmem:[#allocation5 + $0x30] sm:$0xf]
        %v349 = vld [vmem:[#allocation5 + $0x34] sm:$0xf]
        %v350 = vld [vmem:[#allocation5 + $0x38] sm:$0xf]
        %v351 = vld [vmem:[#allocation5 + $0x3c] sm:$0xf]
        %v352 = vld [vmem:[%s2] sm:$0x1]
        %v354 = vlaneseq
        %v355 = vshrl.u32 %v354, 7
        %v356 = vsub.s32 0, %v355
        %v357 = vrot.slane %v352, %v356
        %v487 = vunpack.c.l.b16 %v208
        %v488 = vunpack.c.l.b16 %v209
        %v489 = vunpack.c.l.b16 %v210
        %v490 = vunpack.c.l.b16 %v211
        %v491 = vunpack.c.l.b16 %v212
        %v492 = vunpack.c.l.b16 %v213
        %v493 = vunpack.c.l.b16 %v214
        %v494 = vunpack.c.l.b16 %v215
        %v495 = vunpack.c.l.b16 %v216
        %v496 = vunpack.c.l.b16 %v217
        %v497 = vunpack.c.l.b16 %v218
        %v498 = vunpack.c.l.b16 %v219
        %v499 = vunpack.c.l.b16 %v220
        %v500 = vunpack.c.l.b16 %v221
        %v501 = vunpack.c.l.b16 %v222
        %v502 = vunpack.c.l.b16 %v223
        %v503 = vunpack.c.l.b16 %v224
        %v504 = vunpack.c.l.b16 %v225
        %v505 = vunpack.c.l.b16 %v226
        %v506 = vunpack.c.l.b16 %v227
        %v507 = vunpack.c.l.b16 %v228
        %v508 = vunpack.c.l.b16 %v229
        %v509 = vunpack.c.l.b16 %v230
        %v510 = vunpack.c.l.b16 %v231
        %v511 = vunpack.c.l.b16 %v232
        %v512 = vunpack.c.l.b16 %v233
        %v513 = vunpack.c.l.b16 %v234
        %v514 = vunpack.c.l.b16 %v235
        %v515 = vunpack.c.l.b16 %v236
        %v516 = vunpack.c.l.b16 %v237
        %v517 = vunpack.c.l.b16 %v238
        %v518 = vunpack.c.l.b16 %v239
        %v519 = vunpack.c.l.b16 %v240
        %v520 = vunpack.c.l.b16 %v241
        %v521 = vunpack.c.l.b16 %v242
        %v522 = vunpack.c.l.b16 %v243
        %v523 = vunpack.c.l.b16 %v244
        %v524 = vunpack.c.l.b16 %v245
        %v525 = vunpack.c.l.b16 %v246
        %v526 = vunpack.c.l.b16 %v247
        %v527 = vunpack.c.l.b16 %v248
        %v528 = vunpack.c.l.b16 %v249
        %v529 = vunpack.c.l.b16 %v250
        %v530 = vunpack.c.l.b16 %v251
        %v531 = vunpack.c.l.b16 %v252
        %v532 = vunpack.c.l.b16 %v253
        %v533 = vunpack.c.l.b16 %v254
        %v534 = vunpack.c.l.b16 %v255
        %v535 = vunpack.c.l.b16 %v256
        %v536 = vunpack.c.l.b16 %v257
        %v537 = vunpack.c.l.b16 %v258
        %v538 = vunpack.c.l.b16 %v259
        %v539 = vunpack.c.l.b16 %v260
        %v540 = vunpack.c.l.b16 %v261
        %v541 = vunpack.c.l.b16 %v262
        %v542 = vunpack.c.l.b16 %v263
        %v543 = vunpack.c.l.b16 %v264
        %v544 = vunpack.c.l.b16 %v265
        %v545 = vunpack.c.l.b16 %v266
        %v546 = vunpack.c.l.b16 %v267
        %v547 = vunpack.c.l.b16 %v268
        %v548 = vunpack.c.l.b16 %v269
        %v549 = vunpack.c.l.b16 %v270
        %v550 = vunpack.c.l.b16 %v271
        %v551 = vunpack.c.l.b16 %v272
        %v552 = vunpack.c.l.b16 %v273
        %v553 = vunpack.c.l.b16 %v274
        %v554 = vunpack.c.l.b16 %v275
        %v555 = vunpack.c.l.b16 %v276
        %v556 = vunpack.c.l.b16 %v277
        %v557 = vunpack.c.l.b16 %v278
        %v558 = vunpack.c.l.b16 %v279
        %v559 = vunpack.c.l.b16 %v280
        %v560 = vunpack.c.l.b16 %v281
        %v561 = vunpack.c.l.b16 %v282
        %v562 = vunpack.c.l.b16 %v283
        %v563 = vunpack.c.l.b16 %v284
        %v564 = vunpack.c.l.b16 %v285
        %v565 = vunpack.c.l.b16 %v286
        %v566 = vunpack.c.l.b16 %v287
        %v567 = vunpack.c.l.b16 %v288
        %v568 = vunpack.c.l.b16 %v289
        %v569 = vunpack.c.l.b16 %v290
        %v570 = vunpack.c.l.b16 %v291
        %v571 = vunpack.c.l.b16 %v292
        %v572 = vunpack.c.l.b16 %v293
        %v573 = vunpack.c.l.b16 %v294
        %v574 = vunpack.c.l.b16 %v295
        %v575 = vunpack.c.l.b16 %v296
        %v576 = vunpack.c.l.b16 %v297
        %v577 = vunpack.c.l.b16 %v298
        %v578 = vunpack.c.l.b16 %v299
        %v579 = vunpack.c.l.b16 %v300
        %v580 = vunpack.c.l.b16 %v301
        %v581 = vunpack.c.l.b16 %v302
        %v582 = vunpack.c.l.b16 %v303
        %v583 = vunpack.c.l.b16 %v304
        %v584 = vunpack.c.l.b16 %v305
        %v585 = vunpack.c.l.b16 %v306
        %v586 = vunpack.c.l.b16 %v307
        %v587 = vunpack.c.l.b16 %v308
        %v588 = vunpack.c.l.b16 %v309
        %v589 = vunpack.c.l.b16 %v310
        %v590 = vunpack.c.l.b16 %v311
        %v591 = vunpack.c.l.b16 %v312
        %v592 = vunpack.c.l.b16 %v313
        %v593 = vunpack.c.l.b16 %v314
        %v594 = vunpack.c.l.b16 %v315
        %v595 = vunpack.c.l.b16 %v316
        %v596 = vunpack.c.l.b16 %v317
        %v597 = vunpack.c.l.b16 %v318
        %v598 = vunpack.c.l.b16 %v319
        %v599 = vunpack.c.l.b16 %v320
        %v600 = vunpack.c.l.b16 %v321
        %v601 = vunpack.c.l.b16 %v322
        %v602 = vunpack.c.l.b16 %v323
        %v603 = vunpack.c.l.b16 %v324
        %v604 = vunpack.c.l.b16 %v325
        %v605 = vunpack.c.l.b16 %v326
        %v606 = vunpack.c.l.b16 %v327
        %v607 = vunpack.c.l.b16 %v328
        %v608 = vunpack.c.l.b16 %v329
        %v609 = vunpack.c.l.b16 %v330
        %v610 = vunpack.c.l.b16 %v331
        %v611 = vunpack.c.l.b16 %v332
        %v612 = vunpack.c.l.b16 %v333
        %v613 = vunpack.c.l.b16 %v334
        %v614 = vunpack.c.l.b16 %v335
        %v615 = vpack.c.b16 %v488, %v487
        %v616 = vpack.c.b16 %v490, %v489
        %v617 = vpack.c.b16 %v492, %v491
        %v618 = vpack.c.b16 %v494, %v493
        %v619 = vpack.c.b16 %v496, %v495
        %v620 = vpack.c.b16 %v498, %v497
        %v621 = vpack.c.b16 %v500, %v499
        %v622 = vpack.c.b16 %v502, %v501
        %v623 = vpack.c.b16 %v504, %v503
        %v624 = vpack.c.b16 %v506, %v505
        %v625 = vpack.c.b16 %v508, %v507
        %v626 = vpack.c.b16 %v510, %v509
        %v627 = vpack.c.b16 %v512, %v511
        %v628 = vpack.c.b16 %v514, %v513
        %v629 = vpack.c.b16 %v516, %v515
        %v630 = vpack.c.b16 %v518, %v517
        %v631 = vpack.c.b16 %v520, %v519
        %v632 = vpack.c.b16 %v522, %v521
        %v633 = vpack.c.b16 %v524, %v523
        %v634 = vpack.c.b16 %v526, %v525
        %v635 = vpack.c.b16 %v528, %v527
        %v636 = vpack.c.b16 %v530, %v529
        %v637 = vpack.c.b16 %v532, %v531
        %v638 = vpack.c.b16 %v534, %v533
        %v639 = vpack.c.b16 %v536, %v535
        %v640 = vpack.c.b16 %v538, %v537
        %v641 = vpack.c.b16 %v540, %v539
        %v642 = vpack.c.b16 %v542, %v541
        %v643 = vpack.c.b16 %v544, %v543
        %v644 = vpack.c.b16 %v546, %v545
        %v645 = vpack.c.b16 %v548, %v547
        %v646 = vpack.c.b16 %v550, %v549
        %v647 = vpack.c.b16 %v552, %v551
        %v648 = vpack.c.b16 %v554, %v553
        %v649 = vpack.c.b16 %v556, %v555
        %v650 = vpack.c.b16 %v558, %v557
        %v651 = vpack.c.b16 %v560, %v559
        %v652 = vpack.c.b16 %v562, %v561
        %v653 = vpack.c.b16 %v564, %v563
        %v654 = vpack.c.b16 %v566, %v565
        %v655 = vpack.c.b16 %v568, %v567
        %v656 = vpack.c.b16 %v570, %v569
        %v657 = vpack.c.b16 %v572, %v571
        %v658 = vpack.c.b16 %v574, %v573
        %v659 = vpack.c.b16 %v576, %v575
        %v660 = vpack.c.b16 %v578, %v577
        %v661 = vpack.c.b16 %v580, %v579
        %v662 = vpack.c.b16 %v582, %v581
        %v663 = vpack.c.b16 %v584, %v583
        %v664 = vpack.c.b16 %v586, %v585
        %v665 = vpack.c.b16 %v588, %v587
        %v666 = vpack.c.b16 %v590, %v589
        %v667 = vpack.c.b16 %v592, %v591
        %v668 = vpack.c.b16 %v594, %v593
        %v669 = vpack.c.b16 %v596, %v595
        %v670 = vpack.c.b16 %v598, %v597
        %v671 = vpack.c.b16 %v600, %v599
        %v672 = vpack.c.b16 %v602, %v601
        %v673 = vpack.c.b16 %v604, %v603
        %v674 = vpack.c.b16 %v606, %v605
        %v675 = vpack.c.b16 %v608, %v607
        %v676 = vpack.c.b16 %v610, %v609
        %v677 = vpack.c.b16 %v612, %v611
        %v678 = vpack.c.b16 %v614, %v613
        %v759 = vunpack.c.l.b16 %v336
        %v760 = vunpack.c.l.b16 %v337
        %v761 = vunpack.c.l.b16 %v338
        %v762 = vunpack.c.l.b16 %v339
        %v763 = vunpack.c.l.b16 %v340
        %v764 = vunpack.c.l.b16 %v341
        %v765 = vunpack.c.l.b16 %v342
        %v766 = vunpack.c.l.b16 %v343
        %v767 = vunpack.c.l.b16 %v344
        %v768 = vunpack.c.l.b16 %v345
        %v769 = vunpack.c.l.b16 %v346
        %v770 = vunpack.c.l.b16 %v347
        %v771 = vunpack.c.l.b16 %v348
        %v772 = vunpack.c.l.b16 %v349
        %v773 = vunpack.c.l.b16 %v350
        %v774 = vunpack.c.l.b16 %v351
        %v775 = vpack.c.b16 %v760, %v759
        %v776 = vpack.c.b16 %v762, %v761
        %v777 = vpack.c.b16 %v764, %v763
        %v778 = vpack.c.b16 %v766, %v765
        %v779 = vpack.c.b16 %v768, %v767
        %v780 = vpack.c.b16 %v770, %v769
        %v781 = vpack.c.b16 %v772, %v771
        %v782 = vpack.c.b16 %v774, %v773
        %791 = vmatprep.subr.bf16.mxu0 0
        %792 = vmatpush1.bf16.msra.mxu0 %v775
        %793 = vmatprep.subr.bf16.mxu0 0
        %794 = vmatpush1.bf16.msra.mxu0 %v776
        %795 = vmatprep.subr.bf16.mxu0 0
        %796 = vmatpush1.bf16.msra.mxu0 %v777
        %797 = vmatprep.subr.bf16.mxu0 0
        %798 = vmatpush1.bf16.msra.mxu0 %v778
        %799 = vmatprep.subr.bf16.mxu0 0
        %800 = vmatpush1.bf16.msra.mxu0 %v779
        %801 = vmatprep.subr.bf16.mxu0 0
        %802 = vmatpush1.bf16.msra.mxu0 %v780
        %803 = vmatprep.subr.bf16.mxu0 0
        %804 = vmatpush1.bf16.msra.mxu0 %v781
        %805 = vmatprep.subr.bf16.mxu0 0
        %806 = vmatpush1.bf16.msra.mxu0 %v782
        %807 = vmatprep.subr.bf16.mxu0 0
        %808 = vmatpush1.bf16.msra.mxu0 0
        %809 = vmatprep.subr.bf16.mxu0 0
        %810 = vmatpush1.bf16.msra.mxu0 0
        %811 = vmatprep.subr.bf16.mxu0 0
        %812 = vmatpush1.bf16.msra.mxu0 0
        %813 = vmatprep.subr.bf16.mxu0 0
        %814 = vmatpush1.bf16.msra.mxu0 0
        %815 = vmatprep.subr.bf16.mxu0 0
        %816 = vmatpush1.bf16.msra.mxu0 0
        %817 = vmatprep.subr.bf16.mxu0 0
        %818 = vmatpush1.bf16.msra.mxu0 0
        %819 = vmatprep.subr.bf16.mxu0 0
        %820 = vmatpush1.bf16.msra.mxu0 0
        %821 = vmatprep.subr.bf16.mxu0 0
        %822 = vmatpush1.bf16.msra.mxu0 0
        %823 = vmatprep.mubr.bf16.mxu0 0
        %824 = vmatmul.mubr.bf16.gmra.mrb[0].mxu0 %v615
        %v825 = vpop.f32.mrb[0].mxu0
        %v826 = vadd.f32 %v357, %v825
        %v827 = vpop.f32.mrb[0].mxu0
        %v828 = vpop.f32.mrb[0].mxu0
        %v829 = vadd.f32 %v357, %v828
        %v830 = vpop.f32.mrb[0].mxu0
        %831 = vmatprep.mubr.bf16.mxu0 0
        %832 = vmatmul.mubr.bf16.gmra.mrb[0].mxu0 %v616
        %v833 = vpop.f32.mrb[0].mxu0
        %v834 = vadd.f32 %v357, %v833
        %v835 = vpop.f32.mrb[0].mxu0
        %v836 = vpop.f32.mrb[0].mxu0
        %v837 = vadd.f32 %v357, %v836
        %v838 = vpop.f32.mrb[0].mxu0
        %839 = vmatprep.mubr.bf16.mxu0 0
        %840 = vmatmul.mubr.bf16.gmra.mrb[0].mxu0 %v617
        %v841 = vpop.f32.mrb[0].mxu0
        %v842 = vadd.f32 %v357, %v841
        %v843 = vpop.f32.mrb[0].mxu0
        %v844 = vpop.f32.mrb[0].mxu0
        %v845 = vadd.f32 %v357, %v844
        %v846 = vpop.f32.mrb[0].mxu0
        %847 = vmatprep.mubr.bf16.mxu0 0
        %848 = vmatmul.mubr.bf16.gmra.mrb[0].mxu0 %v618
        %v849 = vpop.f32.mrb[0].mxu0
        %v850 = vadd.f32 %v357, %v849
        %v851 = vpop.f32.mrb[0].mxu0
        %v852 = vpop.f32.mrb[0].mxu0
        %v853 = vadd.f32 %v357, %v852
        %v854 = vpop.f32.mrb[0].mxu0
        %855 = vmatprep.mubr.bf16.mxu0 0
        %856 = vmatmul.mubr.bf16.gmra.mrb[0].mxu0 %v619
        %v857 = vpop.f32.mrb[0].mxu0
        %v858 = vadd.f32 %v357, %v857
        %v859 = vpop.f32.mrb[0].mxu0
        %v860 = vpop.f32.mrb[0].mxu0
        %v861 = vadd.f32 %v357, %v860
        %v862 = vpop.f32.mrb[0].mxu0
        %863 = vmatprep.mubr.bf16.mxu0 0
        %864 = vmatmul.mubr.bf16.gmra.mrb[0].mxu0 %v620
        %v865 = vpop.f32.mrb[0].mxu0
        %v866 = vadd.f32 %v357, %v865
        %v867 = vpop.f32.mrb[0].mxu0
        %v868 = vpop.f32.mrb[0].mxu0
        %v869 = vadd.f32 %v357, %v868
        %v870 = vpop.f32.mrb[0].mxu0
        %871 = vmatprep.mubr.bf16.mxu0 0
        %872 = vmatmul.mubr.bf16.gmra.mrb[0].mxu0 %v621
        %v873 = vpop.f32.mrb[0].mxu0
        %v874 = vadd.f32 %v357, %v873
        %v875 = vpop.f32.mrb[0].mxu0
        %v876 = vpop.f32.mrb[0].mxu0
        %v877 = vadd.f32 %v357, %v876
        %v878 = vpop.f32.mrb[0].mxu0
        %879 = vmatprep.mubr.bf16.mxu0 0
        %880 = vmatmul.mubr.bf16.gmra.mrb[0].mxu0 %v622
        %v881 = vpop.f32.mrb[0].mxu0
        %v882 = vadd.f32 %v357, %v881
        %v883 = vpop.f32.mrb[0].mxu0
        %v884 = vpop.f32.mrb[0].mxu0
        %v885 = vadd.f32 %v357, %v884
        %v886 = vpop.f32.mrb[0].mxu0
        %887 = vmatprep.mubr.bf16.mxu0 0
        %888 = vmatmul.mubr.bf16.gmra.mrb[0].mxu0 %v623
        %v889 = vpop.f32.mrb[0].mxu0
        %v890 = vadd.f32 %v357, %v889
        %v891 = vpop.f32.mrb[0].mxu0
        %v892 = vpop.f32.mrb[0].mxu0
        %v893 = vadd.f32 %v357, %v892
        %v894 = vpop.f32.mrb[0].mxu0
        %895 = vmatprep.mubr.bf16.mxu0 0
        %896 = vmatmul.mubr.bf16.gmra.mrb[0].mxu0 %v624
        %v897 = vpop.f32.mrb[0].mxu0
        %v898 = vadd.f32 %v357, %v897
        %v899 = vpop.f32.mrb[0].mxu0
        %v900 = vpop.f32.mrb[0].mxu0
        %v901 = vadd.f32 %v357, %v900
        %v902 = vpop.f32.mrb[0].mxu0
        %903 = vmatprep.mubr.bf16.mxu0 0
        %904 = vmatmul.mubr.bf16.gmra.mrb[0].mxu0 %v625
        %v905 = vpop.f32.mrb[0].mxu0
        %v906 = vadd.f32 %v357, %v905
        %v907 = vpop.f32.mrb[0].mxu0
        %v908 = vpop.f32.mrb[0].mxu0
        %v909 = vadd.f32 %v357, %v908
        %v910 = vpop.f32.mrb[0].mxu0
        %911 = vmatprep.mubr.bf16.mxu0 0
        %912 = vmatmul.mubr.bf16.gmra.mrb[0].mxu0 %v626
        %v913 = vpop.f32.mrb[0].mxu0
        %v914 = vadd.f32 %v357, %v913
        %v915 = vpop.f32.mrb[0].mxu0
        %v916 = vpop.f32.mrb[0].mxu0
        %v917 = vadd.f32 %v357, %v916
        %v918 = vpop.f32.mrb[0].mxu0
        %919 = vmatprep.mubr.bf16.mxu0 0
        %920 = vmatmul.mubr.bf16.gmra.mrb[0].mxu0 %v627
        %v921 = vpop.f32.mrb[0].mxu0
        %v922 = vadd.f32 %v357, %v921
        %v923 = vpop.f32.mrb[0].mxu0
        %v924 = vpop.f32.mrb[0].mxu0
        %v925 = vadd.f32 %v357, %v924
        %v926 = vpop.f32.mrb[0].mxu0
        %927 = vmatprep.mubr.bf16.mxu0 0
        %928 = vmatmul.mubr.bf16.gmra.mrb[0].mxu0 %v628
        %v929 = vpop.f32.mrb[0].mxu0
        %v930 = vadd.f32 %v357, %v929
        %v931 = vpop.f32.mrb[0].mxu0
        %v932 = vpop.f32.mrb[0].mxu0
        %v933 = vadd.f32 %v357, %v932
        %v934 = vpop.f32.mrb[0].mxu0
        %935 = vmatprep.mubr.bf16.mxu0 0
        %936 = vmatmul.mubr.bf16.gmra.mrb[0].mxu0 %v629
        %v937 = vpop.f32.mrb[0].mxu0
        %v938 = vadd.f32 %v357, %v937
        %v939 = vpop.f32.mrb[0].mxu0
        %v940 = vpop.f32.mrb[0].mxu0
        %v941 = vadd.f32 %v357, %v940
        %v942 = vpop.f32.mrb[0].mxu0
        %943 = vmatprep.mubr.bf16.mxu0 0
        %944 = vmatmul.mubr.bf16.gmra.mrb[0].mxu0 %v630
        %v945 = vpop.f32.mrb[0].mxu0
        %v946 = vadd.f32 %v357, %v945
        %v947 = vpop.f32.mrb[0].mxu0
        %v948 = vpop.f32.mrb[0].mxu0
        %v949 = vadd.f32 %v357, %v948
        %v950 = vpop.f32.mrb[0].mxu0
        %951 = vmatprep.mubr.bf16.mxu0 0
        %952 = vmatmul.mubr.bf16.gmra.mrb[0].mxu0 %v631
        %v953 = vpop.f32.mrb[0].mxu0
        %v954 = vadd.f32 %v357, %v953
        %v955 = vpop.f32.mrb[0].mxu0
        %v956 = vpop.f32.mrb[0].mxu0
        %v957 = vadd.f32 %v357, %v956
        %v958 = vpop.f32.mrb[0].mxu0
        %959 = vmatprep.mubr.bf16.mxu0 0
        %960 = vmatmul.mubr.bf16.gmra.mrb[0].mxu0 %v632
        %v961 = vpop.f32.mrb[0].mxu0
        %v962 = vadd.f32 %v357, %v961
        %v963 = vpop.f32.mrb[0].mxu0
        %v964 = vpop.f32.mrb[0].mxu0
        %v965 = vadd.f32 %v357, %v964
        %v966 = vpop.f32.mrb[0].mxu0
        %967 = vmatprep.mubr.bf16.mxu0 0
        %968 = vmatmul.mubr.bf16.gmra.mrb[0].mxu0 %v633
        %v969 = vpop.f32.mrb[0].mxu0
        %v970 = vadd.f32 %v357, %v969
        %v971 = vpop.f32.mrb[0].mxu0
        %v972 = vpop.f32.mrb[0].mxu0
        %v973 = vadd.f32 %v357, %v972
        %v974 = vpop.f32.mrb[0].mxu0
        %975 = vmatprep.mubr.bf16.mxu0 0
        %976 = vmatmul.mubr.bf16.gmra.mrb[0].mxu0 %v634
        %v977 = vpop.f32.mrb[0].mxu0
        %v978 = vadd.f32 %v357, %v977
        %v979 = vpop.f32.mrb[0].mxu0
        %v980 = vpop.f32.mrb[0].mxu0
        %v981 = vadd.f32 %v357, %v980
        %v982 = vpop.f32.mrb[0].mxu0
        %983 = vmatprep.mubr.bf16.mxu0 0
        %984 = vmatmul.mubr.bf16.gmra.mrb[0].mxu0 %v635
        %v985 = vpop.f32.mrb[0].mxu0
        %v986 = vadd.f32 %v357, %v985
        %v987 = vpop.f32.mrb[0].mxu0
        %v988 = vpop.f32.mrb[0].mxu0
        %v989 = vadd.f32 %v357, %v988
        %v990 = vpop.f32.mrb[0].mxu0
        %991 = vmatprep.mubr.bf16.mxu0 0
        %992 = vmatmul.mubr.bf16.gmra.mrb[0].mxu0 %v636
        %v993 = vpop.f32.mrb[0].mxu0
        %v994 = vadd.f32 %v357, %v993
        %v995 = vpop.f32.mrb[0].mxu0
        %v996 = vpop.f32.mrb[0].mxu0
        %v997 = vadd.f32 %v357, %v996
        %v998 = vpop.f32.mrb[0].mxu0
        %999 = vmatprep.mubr.bf16.mxu0 0
        %1000 = vmatmul.mubr.bf16.gmra.mrb[0].mxu0 %v637
        %v1001 = vpop.f32.mrb[0].mxu0
        %v1002 = vadd.f32 %v357, %v1001
        %v1003 = vpop.f32.mrb[0].mxu0
        %v1004 = vpop.f32.mrb[0].mxu0
        %v1005 = vadd.f32 %v357, %v1004
        %v1006 = vpop.f32.mrb[0].mxu0
        %1007 = vmatprep.mubr.bf16.mxu0 0
        %1008 = vmatmul.mubr.bf16.gmra.mrb[0].mxu0 %v638
        %v1009 = vpop.f32.mrb[0].mxu0
        %v1010 = vadd.f32 %v357, %v1009
        %v1011 = vpop.f32.mrb[0].mxu0
        %v1012 = vpop.f32.mrb[0].mxu0
        %v1013 = vadd.f32 %v357, %v1012
        %v1014 = vpop.f32.mrb[0].mxu0
        %1015 = vmatprep.mubr.bf16.mxu0 0
        %1016 = vmatmul.mubr.bf16.gmra.mrb[0].mxu0 %v639
        %v1017 = vpop.f32.mrb[0].mxu0
        %v1018 = vadd.f32 %v357, %v1017
        %v1019 = vpop.f32.mrb[0].mxu0
        %v1020 = vpop.f32.mrb[0].mxu0
        %v1021 = vadd.f32 %v357, %v1020
        %v1022 = vpop.f32.mrb[0].mxu0
        %1023 = vmatprep.mubr.bf16.mxu0 0
        %1024 = vmatmul.mubr.bf16.gmra.mrb[0].mxu0 %v640
        %v1025 = vpop.f32.mrb[0].mxu0
        %v1026 = vadd.f32 %v357, %v1025
        %v1027 = vpop.f32.mrb[0].mxu0
        %v1028 = vpop.f32.mrb[0].mxu0
        %v1029 = vadd.f32 %v357, %v1028
        %v1030 = vpop.f32.mrb[0].mxu0
        %1031 = vmatprep.mubr.bf16.mxu0 0
        %1032 = vmatmul.mubr.bf16.gmra.mrb[0].mxu0 %v641
        %v1033 = vpop.f32.mrb[0].mxu0
        %v1034 = vadd.f32 %v357, %v1033
        %v1035 = vpop.f32.mrb[0].mxu0
        %v1036 = vpop.f32.mrb[0].mxu0
        %v1037 = vadd.f32 %v357, %v1036
        %v1038 = vpop.f32.mrb[0].mxu0
        %1039 = vmatprep.mubr.bf16.mxu0 0
        %1040 = vmatmul.mubr.bf16.gmra.mrb[0].mxu0 %v642
        %v1041 = vpop.f32.mrb[0].mxu0
        %v1042 = vadd.f32 %v357, %v1041
        %v1043 = vpop.f32.mrb[0].mxu0
        %v1044 = vpop.f32.mrb[0].mxu0
        %v1045 = vadd.f32 %v357, %v1044
        %v1046 = vpop.f32.mrb[0].mxu0
        %1047 = vmatprep.mubr.bf16.mxu0 0
        %1048 = vmatmul.mubr.bf16.gmra.mrb[0].mxu0 %v643
        %v1049 = vpop.f32.mrb[0].mxu0
        %v1050 = vadd.f32 %v357, %v1049
        %v1051 = vpop.f32.mrb[0].mxu0
        %v1052 = vpop.f32.mrb[0].mxu0
        %v1053 = vadd.f32 %v357, %v1052
        %v1054 = vpop.f32.mrb[0].mxu0
        %1055 = vmatprep.mubr.bf16.mxu0 0
        %1056 = vmatmul.mubr.bf16.gmra.mrb[0].mxu0 %v644
        %v1057 = vpop.f32.mrb[0].mxu0
        %v1058 = vadd.f32 %v357, %v1057
        %v1059 = vpop.f32.mrb[0].mxu0
        %v1060 = vpop.f32.mrb[0].mxu0
        %v1061 = vadd.f32 %v357, %v1060
        %v1062 = vpop.f32.mrb[0].mxu0
        %1063 = vmatprep.mubr.bf16.mxu0 0
        %1064 = vmatmul.mubr.bf16.gmra.mrb[0].mxu0 %v645
        %v1065 = vpop.f32.mrb[0].mxu0
        %v1066 = vadd.f32 %v357, %v1065
        %v1067 = vpop.f32.mrb[0].mxu0
        %v1068 = vpop.f32.mrb[0].mxu0
        %v1069 = vadd.f32 %v357, %v1068
        %v1070 = vpop.f32.mrb[0].mxu0
        %1071 = vmatprep.mubr.bf16.mxu0 0
        %1072 = vmatmul.mubr.bf16.gmra.mrb[0].mxu0 %v646
        %v1073 = vpop.f32.mrb[0].mxu0
        %v1074 = vadd.f32 %v357, %v1073
        %v1075 = vpop.f32.mrb[0].mxu0
        %v1076 = vpop.f32.mrb[0].mxu0
        %v1077 = vadd.f32 %v357, %v1076
        %v1078 = vpop.f32.mrb[0].mxu0
        %1079 = vmatprep.mubr.bf16.mxu0 0
        %1080 = vmatmul.mubr.bf16.gmra.mrb[0].mxu0 %v647
        %v1081 = vpop.f32.mrb[0].mxu0
        %v1082 = vadd.f32 %v357, %v1081
        %v1083 = vpop.f32.mrb[0].mxu0
        %v1084 = vpop.f32.mrb[0].mxu0
        %v1085 = vadd.f32 %v357, %v1084
        %v1086 = vpop.f32.mrb[0].mxu0
        %1087 = vmatprep.mubr.bf16.mxu0 0
        %1088 = vmatmul.mubr.bf16.gmra.mrb[0].mxu0 %v648
        %v1089 = vpop.f32.mrb[0].mxu0
        %v1090 = vadd.f32 %v357, %v1089
        %v1091 = vpop.f32.mrb[0].mxu0
        %v1092 = vpop.f32.mrb[0].mxu0
        %v1093 = vadd.f32 %v357, %v1092
        %v1094 = vpop.f32.mrb[0].mxu0
        %1095 = vmatprep.mubr.bf16.mxu0 0
        %1096 = vmatmul.mubr.bf16.gmra.mrb[0].mxu0 %v649
        %v1097 = vpop.f32.mrb[0].mxu0
        %v1098 = vadd.f32 %v357, %v1097
        %v1099 = vpop.f32.mrb[0].mxu0
        %v1100 = vpop.f32.mrb[0].mxu0
        %v1101 = vadd.f32 %v357, %v1100
        %v1102 = vpop.f32.mrb[0].mxu0
        %1103 = vmatprep.mubr.bf16.mxu0 0
        %1104 = vmatmul.mubr.bf16.gmra.mrb[0].mxu0 %v650
        %v1105 = vpop.f32.mrb[0].mxu0
        %v1106 = vadd.f32 %v357, %v1105
        %v1107 = vpop.f32.mrb[0].mxu0
        %v1108 = vpop.f32.mrb[0].mxu0
        %v1109 = vadd.f32 %v357, %v1108
        %v1110 = vpop.f32.mrb[0].mxu0
        %1111 = vmatprep.mubr.bf16.mxu0 0
        %1112 = vmatmul.mubr.bf16.gmra.mrb[0].mxu0 %v651
        %v1113 = vpop.f32.mrb[0].mxu0
        %v1114 = vadd.f32 %v357, %v1113
        %v1115 = vpop.f32.mrb[0].mxu0
        %v1116 = vpop.f32.mrb[0].mxu0
        %v1117 = vadd.f32 %v357, %v1116
        %v1118 = vpop.f32.mrb[0].mxu0
        %1119 = vmatprep.mubr.bf16.mxu0 0
        %1120 = vmatmul.mubr.bf16.gmra.mrb[0].mxu0 %v652
        %v1121 = vpop.f32.mrb[0].mxu0
        %v1122 = vadd.f32 %v357, %v1121
        %v1123 = vpop.f32.mrb[0].mxu0
        %v1124 = vpop.f32.mrb[0].mxu0
        %v1125 = vadd.f32 %v357, %v1124
        %v1126 = vpop.f32.mrb[0].mxu0
        %1127 = vmatprep.mubr.bf16.mxu0 0
        %1128 = vmatmul.mubr.bf16.gmra.mrb[0].mxu0 %v653
        %v1129 = vpop.f32.mrb[0].mxu0
        %v1130 = vadd.f32 %v357, %v1129
        %v1131 = vpop.f32.mrb[0].mxu0
        %v1132 = vpop.f32.mrb[0].mxu0
        %v1133 = vadd.f32 %v357, %v1132
        %v1134 = vpop.f32.mrb[0].mxu0
        %1135 = vmatprep.mubr.bf16.mxu0 0
        %1136 = vmatmul.mubr.bf16.gmra.mrb[0].mxu0 %v654
        %v1137 = vpop.f32.mrb[0].mxu0
        %v1138 = vadd.f32 %v357, %v1137
        %v1139 = vpop.f32.mrb[0].mxu0
        %v1140 = vpop.f32.mrb[0].mxu0
        %v1141 = vadd.f32 %v357, %v1140
        %v1142 = vpop.f32.mrb[0].mxu0
        %1143 = vmatprep.mubr.bf16.mxu0 0
        %1144 = vmatmul.mubr.bf16.gmra.mrb[0].mxu0 %v655
        %v1145 = vpop.f32.mrb[0].mxu0
        %v1146 = vadd.f32 %v357, %v1145
        %v1147 = vpop.f32.mrb[0].mxu0
        %v1148 = vpop.f32.mrb[0].mxu0
        %v1149 = vadd.f32 %v357, %v1148
        %v1150 = vpop.f32.mrb[0].mxu0
        %1151 = vmatprep.mubr.bf16.mxu0 0
        %1152 = vmatmul.mubr.bf16.gmra.mrb[0].mxu0 %v656
        %v1153 = vpop.f32.mrb[0].mxu0
        %v1154 = vadd.f32 %v357, %v1153
        %v1155 = vpop.f32.mrb[0].mxu0
        %v1156 = vpop.f32.mrb[0].mxu0
        %v1157 = vadd.f32 %v357, %v1156
        %v1158 = vpop.f32.mrb[0].mxu0
        %1159 = vmatprep.mubr.bf16.mxu0 0
        %1160 = vmatmul.mubr.bf16.gmra.mrb[0].mxu0 %v657
        %v1161 = vpop.f32.mrb[0].mxu0
        %v1162 = vadd.f32 %v357, %v1161
        %v1163 = vpop.f32.mrb[0].mxu0
        %v1164 = vpop.f32.mrb[0].mxu0
        %v1165 = vadd.f32 %v357, %v1164
        %v1166 = vpop.f32.mrb[0].mxu0
        %1167 = vmatprep.mubr.bf16.mxu0 0
        %1168 = vmatmul.mubr.bf16.gmra.mrb[0].mxu0 %v658
        %v1169 = vpop.f32.mrb[0].mxu0
        %v1170 = vadd.f32 %v357, %v1169
        %v1171 = vpop.f32.mrb[0].mxu0
        %v1172 = vpop.f32.mrb[0].mxu0
        %v1173 = vadd.f32 %v357, %v1172
        %v1174 = vpop.f32.mrb[0].mxu0
        %1175 = vmatprep.mubr.bf16.mxu0 0
        %1176 = vmatmul.mubr.bf16.gmra.mrb[0].mxu0 %v659
        %v1177 = vpop.f32.mrb[0].mxu0
        %v1178 = vadd.f32 %v357, %v1177
        %v1179 = vpop.f32.mrb[0].mxu0
        %v1180 = vpop.f32.mrb[0].mxu0
        %v1181 = vadd.f32 %v357, %v1180
        %v1182 = vpop.f32.mrb[0].mxu0
        %1183 = vmatprep.mubr.bf16.mxu0 0
        %1184 = vmatmul.mubr.bf16.gmra.mrb[0].mxu0 %v660
        %v1185 = vpop.f32.mrb[0].mxu0
        %v1186 = vadd.f32 %v357, %v1185
        %v1187 = vpop.f32.mrb[0].mxu0
        %v1188 = vpop.f32.mrb[0].mxu0
        %v1189 = vadd.f32 %v357, %v1188
        %v1190 = vpop.f32.mrb[0].mxu0
        %1191 = vmatprep.mubr.bf16.mxu0 0
        %1192 = vmatmul.mubr.bf16.gmra.mrb[0].mxu0 %v661
        %v1193 = vpop.f32.mrb[0].mxu0
        %v1194 = vadd.f32 %v357, %v1193
        %v1195 = vpop.f32.mrb[0].mxu0
        %v1196 = vpop.f32.mrb[0].mxu0
        %v1197 = vadd.f32 %v357, %v1196
        %v1198 = vpop.f32.mrb[0].mxu0
        %1199 = vmatprep.mubr.bf16.mxu0 0
        %1200 = vmatmul.mubr.bf16.gmra.mrb[0].mxu0 %v662
        %v1201 = vpop.f32.mrb[0].mxu0
        %v1202 = vadd.f32 %v357, %v1201
        %v1203 = vpop.f32.mrb[0].mxu0
        %v1204 = vpop.f32.mrb[0].mxu0
        %v1205 = vadd.f32 %v357, %v1204
        %v1206 = vpop.f32.mrb[0].mxu0
        %1207 = vmatprep.mubr.bf16.mxu0 0
        %1208 = vmatmul.mubr.bf16.gmra.mrb[0].mxu0 %v663
        %v1209 = vpop.f32.mrb[0].mxu0
        %v1210 = vadd.f32 %v357, %v1209
        %v1211 = vpop.f32.mrb[0].mxu0
        %v1212 = vpop.f32.mrb[0].mxu0
        %v1213 = vadd.f32 %v357, %v1212
        %v1214 = vpop.f32.mrb[0].mxu0
        %1215 = vmatprep.mubr.bf16.mxu0 0
        %1216 = vmatmul.mubr.bf16.gmra.mrb[0].mxu0 %v664
        %v1217 = vpop.f32.mrb[0].mxu0
        %v1218 = vadd.f32 %v357, %v1217
        %v1219 = vpop.f32.mrb[0].mxu0
        %v1220 = vpop.f32.mrb[0].mxu0
        %v1221 = vadd.f32 %v357, %v1220
        %v1222 = vpop.f32.mrb[0].mxu0
        %1223 = vmatprep.mubr.bf16.mxu0 0
        %1224 = vmatmul.mubr.bf16.gmra.mrb[0].mxu0 %v665
        %v1225 = vpop.f32.mrb[0].mxu0
        %v1226 = vadd.f32 %v357, %v1225
        %v1227 = vpop.f32.mrb[0].mxu0
        %v1228 = vpop.f32.mrb[0].mxu0
        %v1229 = vadd.f32 %v357, %v1228
        %v1230 = vpop.f32.mrb[0].mxu0
        %1231 = vmatprep.mubr.bf16.mxu0 0
        %1232 = vmatmul.mubr.bf16.gmra.mrb[0].mxu0 %v666
        %v1233 = vpop.f32.mrb[0].mxu0
        %v1234 = vadd.f32 %v357, %v1233
        %v1235 = vpop.f32.mrb[0].mxu0
        %v1236 = vpop.f32.mrb[0].mxu0
        %v1237 = vadd.f32 %v357, %v1236
        %v1238 = vpop.f32.mrb[0].mxu0
        %1239 = vmatprep.mubr.bf16.mxu0 0
        %1240 = vmatmul.mubr.bf16.gmra.mrb[0].mxu0 %v667
        %v1241 = vpop.f32.mrb[0].mxu0
        %v1242 = vadd.f32 %v357, %v1241
        %v1243 = vpop.f32.mrb[0].mxu0
        %v1244 = vpop.f32.mrb[0].mxu0
        %v1245 = vadd.f32 %v357, %v1244
        %v1246 = vpop.f32.mrb[0].mxu0
        %1247 = vmatprep.mubr.bf16.mxu0 0
        %1248 = vmatmul.mubr.bf16.gmra.mrb[0].mxu0 %v668
        %v1249 = vpop.f32.mrb[0].mxu0
        %v1250 = vadd.f32 %v357, %v1249
        %v1251 = vpop.f32.mrb[0].mxu0
        %v1252 = vpop.f32.mrb[0].mxu0
        %v1253 = vadd.f32 %v357, %v1252
        %v1254 = vpop.f32.mrb[0].mxu0
        %1255 = vmatprep.mubr.bf16.mxu0 0
        %1256 = vmatmul.mubr.bf16.gmra.mrb[0].mxu0 %v669
        %v1257 = vpop.f32.mrb[0].mxu0
        %v1258 = vadd.f32 %v357, %v1257
        %v1259 = vpop.f32.mrb[0].mxu0
        %v1260 = vpop.f32.mrb[0].mxu0
        %v1261 = vadd.f32 %v357, %v1260
        %v1262 = vpop.f32.mrb[0].mxu0
        %1263 = vmatprep.mubr.bf16.mxu0 0
        %1264 = vmatmul.mubr.bf16.gmra.mrb[0].mxu0 %v670
        %v1265 = vpop.f32.mrb[0].mxu0
        %v1266 = vadd.f32 %v357, %v1265
        %v1267 = vpop.f32.mrb[0].mxu0
        %v1268 = vpop.f32.mrb[0].mxu0
        %v1269 = vadd.f32 %v357, %v1268
        %v1270 = vpop.f32.mrb[0].mxu0
        %1271 = vmatprep.mubr.bf16.mxu0 0
        %1272 = vmatmul.mubr.bf16.gmra.mrb[0].mxu0 %v671
        %v1273 = vpop.f32.mrb[0].mxu0
        %v1274 = vadd.f32 %v357, %v1273
        %v1275 = vpop.f32.mrb[0].mxu0
        %v1276 = vpop.f32.mrb[0].mxu0
        %v1277 = vadd.f32 %v357, %v1276
        %v1278 = vpop.f32.mrb[0].mxu0
        %1279 = vmatprep.mubr.bf16.mxu0 0
        %1280 = vmatmul.mubr.bf16.gmra.mrb[0].mxu0 %v672
        %v1281 = vpop.f32.mrb[0].mxu0
        %v1282 = vadd.f32 %v357, %v1281
        %v1283 = vpop.f32.mrb[0].mxu0
        %v1284 = vpop.f32.mrb[0].mxu0
        %v1285 = vadd.f32 %v357, %v1284
        %v1286 = vpop.f32.mrb[0].mxu0
        %1287 = vmatprep.mubr.bf16.mxu0 0
        %1288 = vmatmul.mubr.bf16.gmra.mrb[0].mxu0 %v673
        %v1289 = vpop.f32.mrb[0].mxu0
        %v1290 = vadd.f32 %v357, %v1289
        %v1291 = vpop.f32.mrb[0].mxu0
        %v1292 = vpop.f32.mrb[0].mxu0
        %v1293 = vadd.f32 %v357, %v1292
        %v1294 = vpop.f32.mrb[0].mxu0
        %1295 = vmatprep.mubr.bf16.mxu0 0
        %1296 = vmatmul.mubr.bf16.gmra.mrb[0].mxu0 %v674
        %v1297 = vpop.f32.mrb[0].mxu0
        %v1298 = vadd.f32 %v357, %v1297
        %v1299 = vpop.f32.mrb[0].mxu0
        %v1300 = vpop.f32.mrb[0].mxu0
        %v1301 = vadd.f32 %v357, %v1300
        %v1302 = vpop.f32.mrb[0].mxu0
        %1303 = vmatprep.mubr.bf16.mxu0 0
        %1304 = vmatmul.mubr.bf16.gmra.mrb[0].mxu0 %v675
        %v1305 = vpop.f32.mrb[0].mxu0
        %v1306 = vadd.f32 %v357, %v1305
        %v1307 = vpop.f32.mrb[0].mxu0
        %v1308 = vpop.f32.mrb[0].mxu0
        %v1309 = vadd.f32 %v357, %v1308
        %v1310 = vpop.f32.mrb[0].mxu0
        %1311 = vmatprep.mubr.bf16.mxu0 0
        %1312 = vmatmul.mubr.bf16.gmra.mrb[0].mxu0 %v676
        %v1313 = vpop.f32.mrb[0].mxu0
        %v1314 = vadd.f32 %v357, %v1313
        %v1315 = vpop.f32.mrb[0].mxu0
        %v1316 = vpop.f32.mrb[0].mxu0
        %v1317 = vadd.f32 %v357, %v1316
        %v1318 = vpop.f32.mrb[0].mxu0
        %1319 = vmatprep.mubr.bf16.mxu0 0
        %1320 = vmatmul.mubr.bf16.gmra.mrb[0].mxu0 %v677
        %v1321 = vpop.f32.mrb[0].mxu0
        %v1322 = vadd.f32 %v357, %v1321
        %v1323 = vpop.f32.mrb[0].mxu0
        %v1324 = vpop.f32.mrb[0].mxu0
        %v1325 = vadd.f32 %v357, %v1324
        %v1326 = vpop.f32.mrb[0].mxu0
        %1327 = vmatprep.mubr.bf16.mxu0 0
        %1328 = vmatmul.mubr.bf16.gmra.mrb[0].mxu0 %v678
        %v1329 = vpop.f32.mrb[0].mxu0
        %v1330 = vadd.f32 %v357, %v1329
        %v1331 = vpop.f32.mrb[0].mxu0
        %v1332 = vpop.f32.mrb[0].mxu0
        %v1333 = vadd.f32 %v357, %v1332
        %v1334 = vpop.f32.mrb[0].mxu0
        %1335 = vdwg.mxu0
        %v1336 = vpack.c.bf16 %v829, %v826
        %v1337 = vpack.c.bf16 %v837, %v834
        %v1338 = vpack.c.bf16 %v845, %v842
        %v1339 = vpack.c.bf16 %v853, %v850
        %v1340 = vpack.c.bf16 %v861, %v858
        %v1341 = vpack.c.bf16 %v869, %v866
        %v1342 = vpack.c.bf16 %v877, %v874
        %v1343 = vpack.c.bf16 %v885, %v882
        %v1344 = vpack.c.bf16 %v893, %v890
        %v1345 = vpack.c.bf16 %v901, %v898
        %v1346 = vpack.c.bf16 %v909, %v906
        %v1347 = vpack.c.bf16 %v917, %v914
        %v1348 = vpack.c.bf16 %v925, %v922
        %v1349 = vpack.c.bf16 %v933, %v930
        %v1350 = vpack.c.bf16 %v941, %v938
        %v1351 = vpack.c.bf16 %v949, %v946
        %v1352 = vpack.c.bf16 %v957, %v954
        %v1353 = vpack.c.bf16 %v965, %v962
        %v1354 = vpack.c.bf16 %v973, %v970
        %v1355 = vpack.c.bf16 %v981, %v978
        %v1356 = vpack.c.bf16 %v989, %v986
        %v1357 = vpack.c.bf16 %v997, %v994
        %v1358 = vpack.c.bf16 %v1005, %v1002
        %v1359 = vpack.c.bf16 %v1013, %v1010
        %v1360 = vpack.c.bf16 %v1021, %v1018
        %v1361 = vpack.c.bf16 %v1029, %v1026
        %v1362 = vpack.c.bf16 %v1037, %v1034
        %v1363 = vpack.c.bf16 %v1045, %v1042
        %v1364 = vpack.c.bf16 %v1053, %v1050
        %v1365 = vpack.c.bf16 %v1061, %v1058
        %v1366 = vpack.c.bf16 %v1069, %v1066
        %v1367 = vpack.c.bf16 %v1077, %v1074
        %v1368 = vpack.c.bf16 %v1085, %v1082
        %v1369 = vpack.c.bf16 %v1093, %v1090
        %v1370 = vpack.c.bf16 %v1101, %v1098
        %v1371 = vpack.c.bf16 %v1109, %v1106
        %v1372 = vpack.c.bf16 %v1117, %v1114
        %v1373 = vpack.c.bf16 %v1125, %v1122
        %v1374 = vpack.c.bf16 %v1133, %v1130
        %v1375 = vpack.c.bf16 %v1141, %v1138
        %v1376 = vpack.c.bf16 %v1149, %v1146
        %v1377 = vpack.c.bf16 %v1157, %v1154
        %v1378 = vpack.c.bf16 %v1165, %v1162
        %v1379 = vpack.c.bf16 %v1173, %v1170
        %v1380 = vpack.c.bf16 %v1181, %v1178
        %v1381 = vpack.c.bf16 %v1189, %v1186
        %v1382 = vpack.c.bf16 %v1197, %v1194
        %v1383 = vpack.c.bf16 %v1205, %v1202
        %v1384 = vpack.c.bf16 %v1213, %v1210
        %v1385 = vpack.c.bf16 %v1221, %v1218
        %v1386 = vpack.c.bf16 %v1229, %v1226
        %v1387 = vpack.c.bf16 %v1237, %v1234
        %v1388 = vpack.c.bf16 %v1245, %v1242
        %v1389 = vpack.c.bf16 %v1253, %v1250
        %v1390 = vpack.c.bf16 %v1261, %v1258
        %v1391 = vpack.c.bf16 %v1269, %v1266
        %v1392 = vpack.c.bf16 %v1277, %v1274
        %v1393 = vpack.c.bf16 %v1285, %v1282
        %v1394 = vpack.c.bf16 %v1293, %v1290
        %v1395 = vpack.c.bf16 %v1301, %v1298
        %v1396 = vpack.c.bf16 %v1309, %v1306
        %v1397 = vpack.c.bf16 %v1317, %v1314
        %v1398 = vpack.c.bf16 %v1325, %v1322
        %v1399 = vpack.c.bf16 %v1333, %v1330
        %v1464 = vunpack.c.l.b16 %v1336
        %v1465 = vunpack.c.h.b16 %v1336
        %v1466 = vunpack.c.l.b16 %v1337
        %v1467 = vunpack.c.h.b16 %v1337
        %v1468 = vunpack.c.l.b16 %v1338
        %v1469 = vunpack.c.h.b16 %v1338
        %v1470 = vunpack.c.l.b16 %v1339
        %v1471 = vunpack.c.h.b16 %v1339
        %v1472 = vunpack.c.l.b16 %v1340
        %v1473 = vunpack.c.h.b16 %v1340
        %v1474 = vunpack.c.l.b16 %v1341
        %v1475 = vunpack.c.h.b16 %v1341
        %v1476 = vunpack.c.l.b16 %v1342
        %v1477 = vunpack.c.h.b16 %v1342
        %v1478 = vunpack.c.l.b16 %v1343
        %v1479 = vunpack.c.h.b16 %v1343
        %v1480 = vunpack.c.l.b16 %v1344
        %v1481 = vunpack.c.h.b16 %v1344
        %v1482 = vunpack.c.l.b16 %v1345
        %v1483 = vunpack.c.h.b16 %v1345
        %v1484 = vunpack.c.l.b16 %v1346
        %v1485 = vunpack.c.h.b16 %v1346
        %v1486 = vunpack.c.l.b16 %v1347
        %v1487 = vunpack.c.h.b16 %v1347
        %v1488 = vunpack.c.l.b16 %v1348
        %v1489 = vunpack.c.h.b16 %v1348
        %v1490 = vunpack.c.l.b16 %v1349
        %v1491 = vunpack.c.h.b16 %v1349
        %v1492 = vunpack.c.l.b16 %v1350
        %v1493 = vunpack.c.h.b16 %v1350
        %v1494 = vunpack.c.l.b16 %v1351
        %v1495 = vunpack.c.h.b16 %v1351
        %v1496 = vunpack.c.l.b16 %v1352
        %v1497 = vunpack.c.h.b16 %v1352
        %v1498 = vunpack.c.l.b16 %v1353
        %v1499 = vunpack.c.h.b16 %v1353
        %v1500 = vunpack.c.l.b16 %v1354
        %v1501 = vunpack.c.h.b16 %v1354
        %v1502 = vunpack.c.l.b16 %v1355
        %v1503 = vunpack.c.h.b16 %v1355
        %v1504 = vunpack.c.l.b16 %v1356
        %v1505 = vunpack.c.h.b16 %v1356
        %v1506 = vunpack.c.l.b16 %v1357
        %v1507 = vunpack.c.h.b16 %v1357
        %v1508 = vunpack.c.l.b16 %v1358
        %v1509 = vunpack.c.h.b16 %v1358
        %v1510 = vunpack.c.l.b16 %v1359
        %v1511 = vunpack.c.h.b16 %v1359
        %v1512 = vunpack.c.l.b16 %v1360
        %v1513 = vunpack.c.h.b16 %v1360
        %v1514 = vunpack.c.l.b16 %v1361
        %v1515 = vunpack.c.h.b16 %v1361
        %v1516 = vunpack.c.l.b16 %v1362
        %v1517 = vunpack.c.h.b16 %v1362
        %v1518 = vunpack.c.l.b16 %v1363
        %v1519 = vunpack.c.h.b16 %v1363
        %v1520 = vunpack.c.l.b16 %v1364
        %v1521 = vunpack.c.h.b16 %v1364
        %v1522 = vunpack.c.l.b16 %v1365
        %v1523 = vunpack.c.h.b16 %v1365
        %v1524 = vunpack.c.l.b16 %v1366
        %v1525 = vunpack.c.h.b16 %v1366
        %v1526 = vunpack.c.l.b16 %v1367
        %v1527 = vunpack.c.h.b16 %v1367
        %v1528 = vunpack.c.l.b16 %v1368
        %v1529 = vunpack.c.h.b16 %v1368
        %v1530 = vunpack.c.l.b16 %v1369
        %v1531 = vunpack.c.h.b16 %v1369
        %v1532 = vunpack.c.l.b16 %v1370
        %v1533 = vunpack.c.h.b16 %v1370
        %v1534 = vunpack.c.l.b16 %v1371
        %v1535 = vunpack.c.h.b16 %v1371
        %v1536 = vunpack.c.l.b16 %v1372
        %v1537 = vunpack.c.h.b16 %v1372
        %v1538 = vunpack.c.l.b16 %v1373
        %v1539 = vunpack.c.h.b16 %v1373
        %v1540 = vunpack.c.l.b16 %v1374
        %v1541 = vunpack.c.h.b16 %v1374
        %v1542 = vunpack.c.l.b16 %v1375
        %v1543 = vunpack.c.h.b16 %v1375
        %v1544 = vunpack.c.l.b16 %v1376
        %v1545 = vunpack.c.h.b16 %v1376
        %v1546 = vunpack.c.l.b16 %v1377
        %v1547 = vunpack.c.h.b16 %v1377
        %v1548 = vunpack.c.l.b16 %v1378
        %v1549 = vunpack.c.h.b16 %v1378
        %v1550 = vunpack.c.l.b16 %v1379
        %v1551 = vunpack.c.h.b16 %v1379
        %v1552 = vunpack.c.l.b16 %v1380
        %v1553 = vunpack.c.h.b16 %v1380
        %v1554 = vunpack.c.l.b16 %v1381
        %v1555 = vunpack.c.h.b16 %v1381
        %v1556 = vunpack.c.l.b16 %v1382
        %v1557 = vunpack.c.h.b16 %v1382
        %v1558 = vunpack.c.l.b16 %v1383
        %v1559 = vunpack.c.h.b16 %v1383
        %v1560 = vunpack.c.l.b16 %v1384
        %v1561 = vunpack.c.h.b16 %v1384
        %v1562 = vunpack.c.l.b16 %v1385
        %v1563 = vunpack.c.h.b16 %v1385
        %v1564 = vunpack.c.l.b16 %v1386
        %v1565 = vunpack.c.h.b16 %v1386
        %v1566 = vunpack.c.l.b16 %v1387
        %v1567 = vunpack.c.h.b16 %v1387
        %v1568 = vunpack.c.l.b16 %v1388
        %v1569 = vunpack.c.h.b16 %v1388
        %v1570 = vunpack.c.l.b16 %v1389
        %v1571 = vunpack.c.h.b16 %v1389
        %v1572 = vunpack.c.l.b16 %v1390
        %v1573 = vunpack.c.h.b16 %v1390
        %v1574 = vunpack.c.l.b16 %v1391
        %v1575 = vunpack.c.h.b16 %v1391
        %v1576 = vunpack.c.l.b16 %v1392
        %v1577 = vunpack.c.h.b16 %v1392
        %v1578 = vunpack.c.l.b16 %v1393
        %v1579 = vunpack.c.h.b16 %v1393
        %v1580 = vunpack.c.l.b16 %v1394
        %v1581 = vunpack.c.h.b16 %v1394
        %v1582 = vunpack.c.l.b16 %v1395
        %v1583 = vunpack.c.h.b16 %v1395
        %v1584 = vunpack.c.l.b16 %v1396
        %v1585 = vunpack.c.h.b16 %v1396
        %v1586 = vunpack.c.l.b16 %v1397
        %v1587 = vunpack.c.h.b16 %v1397
        %v1588 = vunpack.c.l.b16 %v1398
        %v1589 = vunpack.c.h.b16 %v1398
        %v1590 = vunpack.c.l.b16 %v1399
        %v1591 = vunpack.c.h.b16 %v1399
        %v1592 = vpack.c.b16 %v1464, %v1464
        %v1593 = vpack.c.b16 %v1465, %v1465
        %v1594 = vpack.c.b16 %v1466, %v1466
        %v1595 = vpack.c.b16 %v1467, %v1467
        %v1596 = vpack.c.b16 %v1468, %v1468
        %v1597 = vpack.c.b16 %v1469, %v1469
        %v1598 = vpack.c.b16 %v1470, %v1470
        %v1599 = vpack.c.b16 %v1471, %v1471
        %v1600 = vpack.c.b16 %v1472, %v1472
        %v1601 = vpack.c.b16 %v1473, %v1473
        %v1602 = vpack.c.b16 %v1474, %v1474
        %v1603 = vpack.c.b16 %v1475, %v1475
        %v1604 = vpack.c.b16 %v1476, %v1476
        %v1605 = vpack.c.b16 %v1477, %v1477
        %v1606 = vpack.c.b16 %v1478, %v1478
        %v1607 = vpack.c.b16 %v1479, %v1479
        %v1608 = vpack.c.b16 %v1480, %v1480
        %v1609 = vpack.c.b16 %v1481, %v1481
        %v1610 = vpack.c.b16 %v1482, %v1482
        %v1611 = vpack.c.b16 %v1483, %v1483
        %v1612 = vpack.c.b16 %v1484, %v1484
        %v1613 = vpack.c.b16 %v1485, %v1485
        %v1614 = vpack.c.b16 %v1486, %v1486
        %v1615 = vpack.c.b16 %v1487, %v1487
        %v1616 = vpack.c.b16 %v1488, %v1488
        %v1617 = vpack.c.b16 %v1489, %v1489
        %v1618 = vpack.c.b16 %v1490, %v1490
        %v1619 = vpack.c.b16 %v1491, %v1491
        %v1620 = vpack.c.b16 %v1492, %v1492
        %v1621 = vpack.c.b16 %v1493, %v1493
        %v1622 = vpack.c.b16 %v1494, %v1494
        %v1623 = vpack.c.b16 %v1495, %v1495
        %v1624 = vpack.c.b16 %v1496, %v1496
        %v1625 = vpack.c.b16 %v1497, %v1497
        %v1626 = vpack.c.b16 %v1498, %v1498
        %v1627 = vpack.c.b16 %v1499, %v1499
        %v1628 = vpack.c.b16 %v1500, %v1500
        %v1629 = vpack.c.b16 %v1501, %v1501
        %v1630 = vpack.c.b16 %v1502, %v1502
        %v1631 = vpack.c.b16 %v1503, %v1503
        %v1632 = vpack.c.b16 %v1504, %v1504
        %v1633 = vpack.c.b16 %v1505, %v1505
        %v1634 = vpack.c.b16 %v1506, %v1506
        %v1635 = vpack.c.b16 %v1507, %v1507
        %v1636 = vpack.c.b16 %v1508, %v1508
        %v1637 = vpack.c.b16 %v1509, %v1509
        %v1638 = vpack.c.b16 %v1510, %v1510
        %v1639 = vpack.c.b16 %v1511, %v1511
        %v1640 = vpack.c.b16 %v1512, %v1512
        %v1641 = vpack.c.b16 %v1513, %v1513
        %v1642 = vpack.c.b16 %v1514, %v1514
        %v1643 = vpack.c.b16 %v1515, %v1515
        %v1644 = vpack.c.b16 %v1516, %v1516
        %v1645 = vpack.c.b16 %v1517, %v1517
        %v1646 = vpack.c.b16 %v1518, %v1518
        %v1647 = vpack.c.b16 %v1519, %v1519
        %v1648 = vpack.c.b16 %v1520, %v1520
        %v1649 = vpack.c.b16 %v1521, %v1521
        %v1650 = vpack.c.b16 %v1522, %v1522
        %v1651 = vpack.c.b16 %v1523, %v1523
        %v1652 = vpack.c.b16 %v1524, %v1524
        %v1653 = vpack.c.b16 %v1525, %v1525
        %v1654 = vpack.c.b16 %v1526, %v1526
        %v1655 = vpack.c.b16 %v1527, %v1527
        %v1656 = vpack.c.b16 %v1528, %v1528
        %v1657 = vpack.c.b16 %v1529, %v1529
        %v1658 = vpack.c.b16 %v1530, %v1530
        %v1659 = vpack.c.b16 %v1531, %v1531
        %v1660 = vpack.c.b16 %v1532, %v1532
        %v1661 = vpack.c.b16 %v1533, %v1533
        %v1662 = vpack.c.b16 %v1534, %v1534
        %v1663 = vpack.c.b16 %v1535, %v1535
        %v1664 = vpack.c.b16 %v1536, %v1536
        %v1665 = vpack.c.b16 %v1537, %v1537
        %v1666 = vpack.c.b16 %v1538, %v1538
        %v1667 = vpack.c.b16 %v1539, %v1539
        %v1668 = vpack.c.b16 %v1540, %v1540
        %v1669 = vpack.c.b16 %v1541, %v1541
        %v1670 = vpack.c.b16 %v1542, %v1542
        %v1671 = vpack.c.b16 %v1543, %v1543
        %v1672 = vpack.c.b16 %v1544, %v1544
        %v1673 = vpack.c.b16 %v1545, %v1545
        %v1674 = vpack.c.b16 %v1546, %v1546
        %v1675 = vpack.c.b16 %v1547, %v1547
        %v1676 = vpack.c.b16 %v1548, %v1548
        %v1677 = vpack.c.b16 %v1549, %v1549
        %v1678 = vpack.c.b16 %v1550, %v1550
        %v1679 = vpack.c.b16 %v1551, %v1551
        %v1680 = vpack.c.b16 %v1552, %v1552
        %v1681 = vpack.c.b16 %v1553, %v1553
        %v1682 = vpack.c.b16 %v1554, %v1554
        %v1683 = vpack.c.b16 %v1555, %v1555
        %v1684 = vpack.c.b16 %v1556, %v1556
        %v1685 = vpack.c.b16 %v1557, %v1557
        %v1686 = vpack.c.b16 %v1558, %v1558
        %v1687 = vpack.c.b16 %v1559, %v1559
        %v1688 = vpack.c.b16 %v1560, %v1560
        %v1689 = vpack.c.b16 %v1561, %v1561
        %v1690 = vpack.c.b16 %v1562, %v1562
        %v1691 = vpack.c.b16 %v1563, %v1563
        %v1692 = vpack.c.b16 %v1564, %v1564
        %v1693 = vpack.c.b16 %v1565, %v1565
        %v1694 = vpack.c.b16 %v1566, %v1566
        %v1695 = vpack.c.b16 %v1567, %v1567
        %v1696 = vpack.c.b16 %v1568, %v1568
        %v1697 = vpack.c.b16 %v1569, %v1569
        %v1698 = vpack.c.b16 %v1570, %v1570
        %v1699 = vpack.c.b16 %v1571, %v1571
        %v1700 = vpack.c.b16 %v1572, %v1572
        %v1701 = vpack.c.b16 %v1573, %v1573
        %v1702 = vpack.c.b16 %v1574, %v1574
        %v1703 = vpack.c.b16 %v1575, %v1575
        %v1704 = vpack.c.b16 %v1576, %v1576
        %v1705 = vpack.c.b16 %v1577, %v1577
        %v1706 = vpack.c.b16 %v1578, %v1578
        %v1707 = vpack.c.b16 %v1579, %v1579
        %v1708 = vpack.c.b16 %v1580, %v1580
        %v1709 = vpack.c.b16 %v1581, %v1581
        %v1710 = vpack.c.b16 %v1582, %v1582
        %v1711 = vpack.c.b16 %v1583, %v1583
        %v1712 = vpack.c.b16 %v1584, %v1584
        %v1713 = vpack.c.b16 %v1585, %v1585
        %v1714 = vpack.c.b16 %v1586, %v1586
        %v1715 = vpack.c.b16 %v1587, %v1587
        %v1716 = vpack.c.b16 %v1588, %v1588
        %v1717 = vpack.c.b16 %v1589, %v1589
        %v1718 = vpack.c.b16 %v1590, %v1590
        %v1719 = vpack.c.b16 %v1591, %v1591
        %1848 = vst [vmem:[%s204] sm:$0xf] %v1592
        %1849 = vst [vmem:[%s204 + $0x4] sm:$0xf] %v1593
        %1850 = vst [vmem:[%s204 + $0x8] sm:$0xf] %v1594
        %1851 = vst [vmem:[%s204 + $0xc] sm:$0xf] %v1595
        %1852 = vst [vmem:[%s204 + $0x10] sm:$0xf] %v1596
        %1853 = vst [vmem:[%s204 + $0x14] sm:$0xf] %v1597
        %1854 = vst [vmem:[%s204 + $0x18] sm:$0xf] %v1598
        %1855 = vst [vmem:[%s204 + $0x1c] sm:$0xf] %v1599
        %1856 = vst [vmem:[%s204 + $0x20] sm:$0xf] %v1600
        %1857 = vst [vmem:[%s204 + $0x24] sm:$0xf] %v1601
        %1858 = vst [vmem:[%s204 + $0x28] sm:$0xf] %v1602
        %1859 = vst [vmem:[%s204 + $0x2c] sm:$0xf] %v1603
        %1860 = vst [vmem:[%s204 + $0x30] sm:$0xf] %v1604
        %1861 = vst [vmem:[%s204 + $0x34] sm:$0xf] %v1605
        %1862 = vst [vmem:[%s204 + $0x38] sm:$0xf] %v1606
        %1863 = vst [vmem:[%s204 + $0x3c] sm:$0xf] %v1607
        %1864 = vst [vmem:[%s204 + $0x40] sm:$0xf] %v1608
        %1865 = vst [vmem:[%s204 + $0x44] sm:$0xf] %v1609
        %1866 = vst [vmem:[%s204 + $0x48] sm:$0xf] %v1610
        %1867 = vst [vmem:[%s204 + $0x4c] sm:$0xf] %v1611
        %1868 = vst [vmem:[%s204 + $0x50] sm:$0xf] %v1612
        %1869 = vst [vmem:[%s204 + $0x54] sm:$0xf] %v1613
        %1870 = vst [vmem:[%s204 + $0x58] sm:$0xf] %v1614
        %1871 = vst [vmem:[%s204 + $0x5c] sm:$0xf] %v1615
        %1872 = vst [vmem:[%s204 + $0x60] sm:$0xf] %v1616
        %1873 = vst [vmem:[%s204 + $0x64] sm:$0xf] %v1617
        %1874 = vst [vmem:[%s204 + $0x68] sm:$0xf] %v1618
        %1875 = vst [vmem:[%s204 + $0x6c] sm:$0xf] %v1619
        %1876 = vst [vmem:[%s204 + $0x70] sm:$0xf] %v1620
        %1877 = vst [vmem:[%s204 + $0x74] sm:$0xf] %v1621
        %1878 = vst [vmem:[%s204 + $0x78] sm:$0xf] %v1622
        %1879 = vst [vmem:[%s204 + $0x7c] sm:$0xf] %v1623
        %1880 = vst [vmem:[%s204 + $0x80] sm:$0xf] %v1624
        %1881 = vst [vmem:[%s204 + $0x84] sm:$0xf] %v1625
        %1882 = vst [vmem:[%s204 + $0x88] sm:$0xf] %v1626
        %1883 = vst [vmem:[%s204 + $0x8c] sm:$0xf] %v1627
        %1884 = vst [vmem:[%s204 + $0x90] sm:$0xf] %v1628
        %1885 = vst [vmem:[%s204 + $0x94] sm:$0xf] %v1629
        %1886 = vst [vmem:[%s204 + $0x98] sm:$0xf] %v1630
        %1887 = vst [vmem:[%s204 + $0x9c] sm:$0xf] %v1631
        %1888 = vst [vmem:[%s204 + $0xa0] sm:$0xf] %v1632
        %1889 = vst [vmem:[%s204 + $0xa4] sm:$0xf] %v1633
        %1890 = vst [vmem:[%s204 + $0xa8] sm:$0xf] %v1634
        %1891 = vst [vmem:[%s204 + $0xac] sm:$0xf] %v1635
        %1892 = vst [vmem:[%s204 + $0xb0] sm:$0xf] %v1636
        %1893 = vst [vmem:[%s204 + $0xb4] sm:$0xf] %v1637
        %1894 = vst [vmem:[%s204 + $0xb8] sm:$0xf] %v1638
        %1895 = vst [vmem:[%s204 + $0xbc] sm:$0xf] %v1639
        %1896 = vst [vmem:[%s204 + $0xc0] sm:$0xf] %v1640
        %1897 = vst [vmem:[%s204 + $0xc4] sm:$0xf] %v1641
        %1898 = vst [vmem:[%s204 + $0xc8] sm:$0xf] %v1642
        %1899 = vst [vmem:[%s204 + $0xcc] sm:$0xf] %v1643
        %1900 = vst [vmem:[%s204 + $0xd0] sm:$0xf] %v1644
        %1901 = vst [vmem:[%s204 + $0xd4] sm:$0xf] %v1645
        %1902 = vst [vmem:[%s204 + $0xd8] sm:$0xf] %v1646
        %1903 = vst [vmem:[%s204 + $0xdc] sm:$0xf] %v1647
        %1904 = vst [vmem:[%s204 + $0xe0] sm:$0xf] %v1648
        %1905 = vst [vmem:[%s204 + $0xe4] sm:$0xf] %v1649
        %1906 = vst [vmem:[%s204 + $0xe8] sm:$0xf] %v1650
        %1907 = vst [vmem:[%s204 + $0xec] sm:$0xf] %v1651
        %1908 = vst [vmem:[%s204 + $0xf0] sm:$0xf] %v1652
        %1909 = vst [vmem:[%s204 + $0xf4] sm:$0xf] %v1653
        %1910 = vst [vmem:[%s204 + $0xf8] sm:$0xf] %v1654
        %1911 = vst [vmem:[%s204 + $0xfc] sm:$0xf] %v1655
        %1912 = vst [vmem:[%s204 + $0x100] sm:$0xf] %v1656
        %1913 = vst [vmem:[%s204 + $0x104] sm:$0xf] %v1657
        %1914 = vst [vmem:[%s204 + $0x108] sm:$0xf] %v1658
        %1915 = vst [vmem:[%s204 + $0x10c] sm:$0xf] %v1659
        %1916 = vst [vmem:[%s204 + $0x110] sm:$0xf] %v1660
        %1917 = vst [vmem:[%s204 + $0x114] sm:$0xf] %v1661
        %1918 = vst [vmem:[%s204 + $0x118] sm:$0xf] %v1662
        %1919 = vst [vmem:[%s204 + $0x11c] sm:$0xf] %v1663
        %1920 = vst [vmem:[%s204 + $0x120] sm:$0xf] %v1664
        %1921 = vst [vmem:[%s204 + $0x124] sm:$0xf] %v1665
        %1922 = vst [vmem:[%s204 + $0x128] sm:$0xf] %v1666
        %1923 = vst [vmem:[%s204 + $0x12c] sm:$0xf] %v1667
        %1924 = vst [vmem:[%s204 + $0x130] sm:$0xf] %v1668
        %1925 = vst [vmem:[%s204 + $0x134] sm:$0xf] %v1669
        %1926 = vst [vmem:[%s204 + $0x138] sm:$0xf] %v1670
        %1927 = vst [vmem:[%s204 + $0x13c] sm:$0xf] %v1671
        %1928 = vst [vmem:[%s204 + $0x140] sm:$0xf] %v1672
        %1929 = vst [vmem:[%s204 + $0x144] sm:$0xf] %v1673
        %1930 = vst [vmem:[%s204 + $0x148] sm:$0xf] %v1674
        %1931 = vst [vmem:[%s204 + $0x14c] sm:$0xf] %v1675
        %1932 = vst [vmem:[%s204 + $0x150] sm:$0xf] %v1676
        %1933 = vst [vmem:[%s204 + $0x154] sm:$0xf] %v1677
        %1934 = vst [vmem:[%s204 + $0x158] sm:$0xf] %v1678
        %1935 = vst [vmem:[%s204 + $0x15c] sm:$0xf] %v1679
        %1936 = vst [vmem:[%s204 + $0x160] sm:$0xf] %v1680
        %1937 = vst [vmem:[%s204 + $0x164] sm:$0xf] %v1681
        %1938 = vst [vmem:[%s204 + $0x168] sm:$0xf] %v1682
        %1939 = vst [vmem:[%s204 + $0x16c] sm:$0xf] %v1683
        %1940 = vst [vmem:[%s204 + $0x170] sm:$0xf] %v1684
        %1941 = vst [vmem:[%s204 + $0x174] sm:$0xf] %v1685
        %1942 = vst [vmem:[%s204 + $0x178] sm:$0xf] %v1686
        %1943 = vst [vmem:[%s204 + $0x17c] sm:$0xf] %v1687
        %1944 = vst [vmem:[%s204 + $0x180] sm:$0xf] %v1688
        %1945 = vst [vmem:[%s204 + $0x184] sm:$0xf] %v1689
        %1946 = vst [vmem:[%s204 + $0x188] sm:$0xf] %v1690
        %1947 = vst [vmem:[%s204 + $0x18c] sm:$0xf] %v1691
        %1948 = vst [vmem:[%s204 + $0x190] sm:$0xf] %v1692
        %1949 = vst [vmem:[%s204 + $0x194] sm:$0xf] %v1693
        %1950 = vst [vmem:[%s204 + $0x198] sm:$0xf] %v1694
        %1951 = vst [vmem:[%s204 + $0x19c] sm:$0xf] %v1695
        %1952 = vst [vmem:[%s204 + $0x1a0] sm:$0xf] %v1696
        %1953 = vst [vmem:[%s204 + $0x1a4] sm:$0xf] %v1697
        %1954 = vst [vmem:[%s204 + $0x1a8] sm:$0xf] %v1698
        %1955 = vst [vmem:[%s204 + $0x1ac] sm:$0xf] %v1699
        %1956 = vst [vmem:[%s204 + $0x1b0] sm:$0xf] %v1700
        %1957 = vst [vmem:[%s204 + $0x1b4] sm:$0xf] %v1701
        %1958 = vst [vmem:[%s204 + $0x1b8] sm:$0xf] %v1702
        %1959 = vst [vmem:[%s204 + $0x1bc] sm:$0xf] %v1703
        %1960 = vst [vmem:[%s204 + $0x1c0] sm:$0xf] %v1704
        %1961 = vst [vmem:[%s204 + $0x1c4] sm:$0xf] %v1705
        %1962 = vst [vmem:[%s204 + $0x1c8] sm:$0xf] %v1706
        %1963 = vst [vmem:[%s204 + $0x1cc] sm:$0xf] %v1707
        %1964 = vst [vmem:[%s204 + $0x1d0] sm:$0xf] %v1708
        %1965 = vst [vmem:[%s204 + $0x1d4] sm:$0xf] %v1709
        %1966 = vst [vmem:[%s204 + $0x1d8] sm:$0xf] %v1710
        %1967 = vst [vmem:[%s204 + $0x1dc] sm:$0xf] %v1711
        %1968 = vst [vmem:[%s204 + $0x1e0] sm:$0xf] %v1712
        %1969 = vst [vmem:[%s204 + $0x1e4] sm:$0xf] %v1713
        %1970 = vst [vmem:[%s204 + $0x1e8] sm:$0xf] %v1714
        %1971 = vst [vmem:[%s204 + $0x1ec] sm:$0xf] %v1715
        %1972 = vst [vmem:[%s204 + $0x1f0] sm:$0xf] %v1716
        %1973 = vst [vmem:[%s204 + $0x1f4] sm:$0xf] %v1717
        %1974 = vst [vmem:[%s204 + $0x1f8] sm:$0xf] %v1718
        %1975 = vst [vmem:[%s204 + $0x1fc] sm:$0xf] %v1719
        %s1976 = sand.u32 %s97, 1
        %s1977 = scalar_lea.sflag [#allocation4], %s1976
        %s1978 = sand.u32 %s97, 1
        %s1979 = smul.addr %s1978, 512
        %s1980 = scalar_lea.vmem [#allocation7], %s1979
        // Predicated region
        $region41: #{tpu_custom_call.1} parent=31 // pred_check
          %p1981 = pneg %p107
        $region42: #{tpu_custom_call.1} parent=31 // pred_check_branch
          %1983 = sbr.rel (%p1981) target = $region44
        $region43: #{tpu_custom_call.1} parent=31 // pred_region
          %s1984 = smul.u32 8, %s21
          %s1986 = ssub.s32 8192, 8192
          %1987 = vsyncadd %s1977, %s1986
          %s1988 = smul.addr %s1984, 16
          %s1989 = smul.addr %s1988, 64
          %s1990 = scalar_lea.hbm %s3, %s1989
          %s1991 = sshll.u32 %s1980, 4
          %s1992 = int_to_ptr.vmem [resolvable:$true] %s1991
          %1997 = dma.vmem_to_hbm [thread:$0]  %s1992, 8192, %s1990, %s1977, 64, 64, 4
        $region44: #{tpu_custom_call.1} parent=31 // pred_fallthru
          _
      $region32: #{tpu_custom_call.1} parent=5 // pred_fallthru
        _
      %p1998 = scmp.le.s32.totalorder 2, %s16
      // Predicated region
      $region45: #{tpu_custom_call.1} parent=5 // pred_check
        %p1999 = pneg %p1998
      $region46: #{tpu_custom_call.1} parent=5 // pred_check_branch
        %2001 = sbr.rel (%p1999) target = $region48
      $region47: #{tpu_custom_call.1} parent=5 // pred_region
        %s2002 = ssub.s32 %s16, 2
        // Predicated region
        $region49: #{tpu_custom_call.1} parent=47 // pred_check
          %p2003 = pneg %p113
        $region50: #{tpu_custom_call.1} parent=47 // pred_check_branch
          %2005 = sbr.rel (%p2003) target = $region52
        $region51: #{tpu_custom_call.1} parent=47 // pred_region
          %s2006 = sand.u32 %s98, 1
          %s2007 = scalar_lea.sflag [#allocation4], %s2006
          %s2008 = sand.u32 %s98, 1
          %s2009 = smul.addr %s2008, 512
          %s2010 = scalar_lea.vmem [#allocation7], %s2009
          %2011 = dma.done %s2007, 8192
        $region52: #{tpu_custom_call.1} parent=47 // pred_fallthru
          _
      $region48: #{tpu_custom_call.1} parent=5 // pred_fallthru
        _
    $region6: #{tpu_custom_call.1} parent=1 // loop_footer
      %s20 = sadd.s32 1, %s16
    $region7: #{tpu_custom_call.1} parent=1 // loop_footer_branch
      %15 = sbr.rel target = $region3
    $region8: #{tpu_custom_call.1} parent=1 // loop_exit
      _
    %2012 = vsyncpa [#allocation3], 1
    %s2013 = scalar_lea.sflag [#allocation3], 1
    %2014 = vsyncpa %s2013, 1
    %2015 = vsyncpa [#allocation6], 1
    %2016 = vsyncpa [#allocation4], 1
    %s2017 = scalar_lea.sflag [#allocation4], 1
    %2018 = vsyncpa %s2017, 1

</llo_original>
